<compile_context>
chip_gen: v6e
topology: v6e:2x2x1
jax: 0.10.0
libtpu: 0.0.40
codegen_flags: <defaults>
</compile_context>

<pallas_src>
import functools

import jax
import jax.numpy as jnp
import numpy as np
from jax import lax
from jax.experimental import pallas as pl
from jax.experimental.pallas import tpu as pltpu


# ----------------------------------------------------------------------------
# In-kernel helpers
# ----------------------------------------------------------------------------
# TODO(synk): on v5e these concat-with-zero shifts could instead use
#             pltpu.roll + an edge mask (moves tap building from the single
#             vector-store slot onto the XLU); kept as concats for robustness.
def _shift_h(y, d):
    """result[h, w, c] = y[h + d, w, c]  (zero where out of range), d in {-1,+1}."""
    H = y.shape[0]
    z = jnp.zeros((1,) + y.shape[1:], y.dtype)
    if d == 1:
        return jnp.concatenate([y[1:], z], axis=0)
    return jnp.concatenate([z, y[:H - 1]], axis=0)


def _shift_w(y, d):
    """result[h, w, c] = y[h, w + d, c]  (zero where out of range), d in {-1,+1}."""
    W = y.shape[1]
    z = jnp.zeros((y.shape[0], 1) + y.shape[2:], y.dtype)
    if d == 1:
        return jnp.concatenate([y[:, 1:], z], axis=1)
    return jnp.concatenate([z, y[:, :W - 1]], axis=1)


def _conv3x3(y, w_ref):
    """3x3 'same' conv as 3 kh-grouped accumulating matmuls (K = 3C each).

    y:     (Hb, W, C) bf16 activations.
    w_ref: (3, 3*C, Dout) bf16 weight, rows of each kh slab ordered (kw, cin).
    Returns (Hb, W, Dout) float32.
    """
    hb, W, C = y.shape
    dout = w_ref.shape[2]
    rows = (_shift_h(y, -1), y, _shift_h(y, 1))            # kh = 0, 1, 2
    acc = None
    for kh in range(3):
        r = rows[kh]
        cols = jnp.concatenate([_shift_w(r, -1), r, _shift_w(r, 1)], axis=-1)
        part = jnp.dot(cols.reshape(hb * W, 3 * C), w_ref[kh],
                       preferred_element_type=jnp.float32)
        acc = part if acc is None else acc + part
    return acc.reshape(hb, W, dout)


def _bn_relu(x_f32, scale, shift):
    return jnp.maximum(x_f32 * scale + shift, 0.0)


def _row_mask(th, hb):
    """(hb, 1, 1) f32 mask: 1 where the buffer row maps to a real image row."""
    t = pl.program_id(1)
    H = th * pl.num_programs(1)
    j = lax.broadcasted_iota(jnp.int32, (hb, 1, 1), 0)
    g = j + t * th - 2                                     # global image row
    return jnp.logical_and(g >= 0, g < H).astype(jnp.float32)


# ----------------------------------------------------------------------------
# Kernel: upsample=False  (BN-ReLU-Conv3x3, BN-ReLU-Conv3x3, residual add)
# x_ref block: (1, 1, TH+4, W, C) bf16 window = image rows [t*TH-2, t*TH+TH+2)
# (out-of-image rows arrive zero-padded and are re-zeroed after BN/ReLU).
# ----------------------------------------------------------------------------
def _decoder_res_kernel(x_ref, sc_ref, sh_ref, w1_ref, w2_ref, o_ref,
                        *, th, fold):
    hb, W = x_ref.shape[2], x_ref.shape[3]
    D = w2_ref.shape[2]
    mask = _row_mask(th, hb)

    x = x_ref[0, 0].astype(jnp.float32)                           # (hb, W, C)

    # --- weight_layer1: BN + ReLU (f32 VPU) + Conv3x3 (bf16 MXU, f32 acc) ---
    y1 = (_bn_relu(x, sc_ref[0], sh_ref[0]) * mask).astype(jnp.bfloat16)
    z = _conv3x3(y1, w1_ref)                                      # (hb, W, C)

    # --- weight_layer2: BN + ReLU + Conv3x3 ---
    y2 = (_bn_relu(z, sc_ref[1], sh_ref[1]) * mask).astype(jnp.bfloat16)
    o = _conv3x3(y2, w2_ref)                                      # (hb, W, D)

    # --- residual add on the TH kept rows (identity = x; requires D == C) ---
    o = (o[2:2 + th] + x[2:2 + th]).astype(o_ref.dtype)           # (th, W, D)
    if fold:                       # lane-dense store for D < 128
        o_ref[0, 0] = o.reshape(th, W * D)
    else:                          # natural NHWC block for D >= 128
        o_ref[0] = o


# ----------------------------------------------------------------------------
# Kernel: upsample=True
#   weight_layer2 = BN + ReLU + ConvTranspose2d(k=3, s=2, p=1, output_p=1)
#   upsample path = BN + ReLU + ConvTranspose2d(k=1, s=2, output_p=1)
# Parity-plane formulation (W[kh,kw] = torch ConvT weight[:, :, kh, kw]):
#   out[2a  ,2b  ] = v[a,b]@W[1,1] + y3[a,b]@Wup                       (ee)
#   out[2a  ,2b+1] = v[a,b]@W[1,2] + v[a,b+1]@W[1,0]                   (eo)
#   out[2a+1,2b  ] = v[a,b]@W[2,1] + v[a+1,b]@W[0,1]                   (oe)
#   out[2a+1,2b+1] = v[a,b]@W[2,2] + v[a,b+1]@W[2,0]
#                    + v[a+1,b]@W[0,2] + v[a+1,b+1]@W[0,0]             (oo)
# Matmuls are grouped by input tap (N-stacked weights) so no tap is copied
# into a K-stacked operand.
# ----------------------------------------------------------------------------
def _decoder_res_kernel_up(x_ref, sc_ref, sh_ref, w1_ref,
                           wA_ref, wB_ref, wC_ref, wD_ref, wU_ref,
                           o_ref, *, th, fold):
    hb, W, C = x_ref.shape[2], x_ref.shape[3], x_ref.shape[4]
    D = wD_ref.shape[1]
    mask = _row_mask(th, hb)

    x = x_ref[0, 0].astype(jnp.float32)                           # (hb, W, C)

    # --- weight_layer1: BN + ReLU + Conv3x3 ---
    y1 = (_bn_relu(x, sc_ref[0], sh_ref[0]) * mask).astype(jnp.bfloat16)
    z = _conv3x3(y1, w1_ref)                                      # (hb, W, C)

    # --- BN + ReLU for the two transposed-conv inputs ---
    y2 = (_bn_relu(z, sc_ref[1], sh_ref[1]) * mask).astype(jnp.bfloat16)
    y3 = _bn_relu(x, sc_ref[2], sh_ref[2]).astype(jnp.bfloat16)   # in-image only

    hw = th * W
    vA = y2[2:2 + th]                       # v[a,   b  ]   (th, W, C)
    vC = y2[3:3 + th]                       # v[a+1, b  ]  (halo row / masked)
    vB = _shift_w(vA, 1)                    # v[a,   b+1]
    vD = _shift_w(vC, 1)                    # v[a+1, b+1]
    u = y3[2:2 + th]

    dot = functools.partial(jnp.dot, preferred_element_type=jnp.float32)
    pA = dot(vA.reshape(hw, C), wA_ref[...])        # (hw, 4D)
    pB = dot(vB.reshape(hw, C), wB_ref[...])        # (hw, 2D)
    pC = dot(vC.reshape(hw, C), wC_ref[...])        # (hw, 2D)
    pD = dot(vD.reshape(hw, C), wD_ref[...])        # (hw, D)
    pU = dot(u.reshape(hw, C), wU_ref[...])         # (hw, D)

    ee = (pA[:, 0:D] + pU).reshape(th, W, D)
    eo = (pA[:, D:2 * D] + pB[:, 0:D]).reshape(th, W, D)
    oe = (pA[:, 2 * D:3 * D] + pC[:, 0:D]).reshape(th, W, D)
    oo = (pA[:, 3 * D:] + pB[:, D:] + pC[:, D:] + pD).reshape(th, W, D)

    if fold:
        # Lane-dense row-parity slabs (D < 128): columns interleaved in-kernel.
        even = jnp.concatenate([ee, eo], axis=-1).reshape(th, 2 * W * D)
        odd = jnp.concatenate([oe, oo], axis=-1).reshape(th, 2 * W * D)
        o_ref[0, 0, 0] = even.astype(o_ref.dtype)
        o_ref[0, 1, 0] = odd.astype(o_ref.dtype)
    else:
        # Natural parity-plane NHWC blocks (D >= 128): already lane-dense.
        o_ref[0, 0] = ee.astype(o_ref.dtype)
        o_ref[0, 1] = eo.astype(o_ref.dtype)
        o_ref[0, 2] = oe.astype(o_ref.dtype)
        o_ref[0, 3] = oo.astype(o_ref.dtype)


# ----------------------------------------------------------------------------
# Per-generation VMEM budget and row-tile selection
# ----------------------------------------------------------------------------
def _vmem_limit_bytes():
    """Capacity minus headroom: ~48 MiB on v7x, capped at 100 MiB on v5e/v6e."""
    try:
        cap = pltpu.get_tpu_info().vmem_capacity_bytes
    except Exception:
        cap = 64 * 1024 * 1024
    return int(max(min(cap - 16 * 1024 * 1024, 100 * 1024 * 1024),
                   32 * 1024 * 1024))


def _pick_row_tile(H, W, C, D, upsample, vmem_limit_bytes):
    """Largest divisor of H whose rough live-VMEM estimate fits the budget."""
    def est(th):
        hb = th + 4
        act = hb * W * C
        b = 2 * 2 * act                    # bf16 input window, double-buffered
        b += 3 * 2 * act                   # (hb, W, 3C) kh-group operand, bf16
        b += 2 * 4 * act                   # conv1 out / BN intermediates, f32
        if upsample:
            b += 4 * th * W * 4 * D        # pA accumulator, f32
            b += 2 * 2 * 4 * th * W * D    # bf16 output tile, double-buffered
        else:
            b += 4 * hb * W * D            # conv2 accumulator, f32
            b += 2 * 2 * th * W * D        # bf16 output tile, double-buffered
        return b

    budget = int(0.6 * vmem_limit_bytes)   # headroom for weights + scratch
    best = 1
    for th in range(1, H + 1):
        if H % th == 0 and est(th) <= budget:
            best = th
    return best


# ----------------------------------------------------------------------------
# Wrapper (NCHW in / NCHW out by default; channels_last=True keeps NHWC)
# ----------------------------------------------------------------------------
def decoder_residual_layer(x, params, upsample, *, row_tile=None,
                           fold_lanes=None, channels_last=False):
    xh = x.astype(jnp.bfloat16)                       # bf16 activations in HBM
    if not channels_last:
        xh = jnp.transpose(xh, (0, 2, 3, 1))          # NCHW -> NHWC
    N, H, W, C = xh.shape

    scales = params["scales"].astype(jnp.float32)
    shifts = params["shifts"].astype(jnp.float32)
    # kh-grouped 3x3 weight: (3,3,Cin,Cout) -> (3, 3*Cin, Cout), bf16 operands.
    w1 = params["w1"].reshape(3, 3 * C, C).astype(jnp.bfloat16)

    if not upsample:
        D = params["w2"].shape[3]
        assert D == C, "residual add requires output_channels == hidden_channels"
        w2 = params["w2"].reshape(3, 3 * C, D).astype(jnp.bfloat16)
    else:
        wt2, wup = params["wt2"], params["wup"]       # (3,3,C,D), (C,D)
        D = wt2.shape[3]
        bf = lambda a: a.astype(jnp.bfloat16)
        # Tap-grouped (N-stacked) parity weights.
        wA = bf(jnp.concatenate([wt2[1, 1], wt2[1, 2],
                                 wt2[2, 1], wt2[2, 2]], axis=1))   # (C, 4D)
        wB = bf(jnp.concatenate([wt2[1, 0], wt2[2, 0]], axis=1))   # (C, 2D)
        wC = bf(jnp.concatenate([wt2[0, 1], wt2[0, 2]], axis=1))   # (C, 2D)
        wD = bf(wt2[0, 0])                                         # (C, D)
        wU = bf(wup)                                               # (C, D)

    vmem_limit = _vmem_limit_bytes()
    fold = (D < 128) if fold_lanes is None else bool(fold_lanes)
    th = row_tile if row_tile is not None else _pick_row_tile(
        H, W, C, D, upsample, vmem_limit)
    assert H % th == 0, f"row_tile {th} must divide H={H}"
    T = H // th
    hb = th + 4

    # Haloed row windows: rows [t*th-2, t*th+th+2) of the image, zero padded at
    # the top/bottom image edges (re-masked after BN/ReLU inside the kernel).
    xp = jnp.pad(xh, ((0, 0), (2, 2), (0, 0), (0, 0)))
    if T == 1:
        xw = xp[:, None]                                        # (N,1,hb,W,C)
    else:
        xw = jnp.concatenate(
            [xp[:, t * th:t * th + hb][:, None] for t in range(T)], axis=1)

    # Whole-array blocks, constant across the grid.
    # NOTE: on v7x, pipeline_mode=pl.Buffered(1) on these specs would
    # single-buffer the resident weights and free a few MiB of VMEM.
    def const(a):
        nd = a.ndim
        return pl.BlockSpec(a.shape, lambda n, t, _nd=nd: (0,) * _nd)

    x_spec = pl.BlockSpec((1, 1, hb, W, C), lambda n, t: (n, t, 0, 0, 0))
    cparams = pltpu.CompilerParams(
        dimension_semantics=("parallel", "parallel"),
        vmem_limit_bytes=vmem_limit)

    if not upsample:
        kern = functools.partial(_decoder_res_kernel, th=th, fold=fold)
        if fold:
            out_shape = jax.ShapeDtypeStruct((N, T, th, W * D), jnp.bfloat16)
            out_spec = pl.BlockSpec((1, 1, th, W * D), lambda n, t: (n, t, 0, 0))
        else:
            out_shape = jax.ShapeDtypeStruct((N, H, W, D), jnp.bfloat16)
            out_spec = pl.BlockSpec((1, th, W, D), lambda n, t: (n, t, 0, 0))
        out = pl.pallas_call(
            kern,
            out_shape=out_shape,
            grid_spec=pltpu.PrefetchScalarGridSpec(
                num_scalar_prefetch=0,
                grid=(N, T),
                in_specs=[x_spec, const(scales), const(shifts),
                          const(w1), const(w2)],
                out_specs=out_spec),
            compiler_params=cparams,
        )(xw, scales, shifts, w1, w2)
        out = out.reshape(N, H, W, D) if fold else out
    else:
        kern = functools.partial(_decoder_res_kernel_up, th=th, fold=fold)
        if fold:
            out_shape = jax.ShapeDtypeStruct((N, 2, T, th, 2 * W * D),
                                             jnp.bfloat16)
            out_spec = pl.BlockSpec((1, 2, 1, th, 2 * W * D),
                                    lambda n, t: (n, 0, t, 0, 0))
        else:
            out_shape = jax.ShapeDtypeStruct((N, 4, H, W, D), jnp.bfloat16)
            out_spec = pl.BlockSpec((1, 4, th, W, D),
                                    lambda n, t: (n, 0, t, 0, 0))
        out = pl.pallas_call(
            kern,
            out_shape=out_shape,
            grid_spec=pltpu.PrefetchScalarGridSpec(
                num_scalar_prefetch=0,
                grid=(N, T),
                in_specs=[x_spec, const(scales), const(shifts), const(w1),
                          const(wA), const(wB), const(wC), const(wD),
                          const(wU)],
                out_specs=out_spec),
            compiler_params=cparams,
        )(xw, scales, shifts, w1, wA, wB, wC, wD, wU)
        if fold:
            # (N,2,T,th,2WD) -> (N,2,H,2W,D) -> row-parity interleave -> NHWC
            out = out.reshape(N, 2, H, 2 * W, D)
            out = jnp.transpose(out, (0, 2, 1, 3, 4)).reshape(N, 2 * H, 2 * W, D)
        else:
            # (N,4,H,W,D) with plane index (rp, cp) -> interleave rows & cols
            out = out.reshape(N, 2, 2, H, W, D)
            out = jnp.transpose(out, (0, 3, 1, 4, 2, 5)).reshape(
                N, 2 * H, 2 * W, D)

    if channels_last:
        return out
    return jnp.transpose(out, (0, 3, 1, 2))                       # -> NCHW


# ----------------------------------------------------------------------------
# Deterministic synthetic parameters (shapes from the module's __init__).
# All convs in the module are bias=False, so no bias parameters exist.
# ----------------------------------------------------------------------------
def make_params(key, hidden, output, upsample):
    ks = jax.random.split(key, 8)
    n_bn = 3 if upsample else 2
    eps = 1e-5                                    # PyTorch BatchNorm2d default
    gamma = jax.random.uniform(ks[0], (n_bn, hidden), jnp.float32, 0.5, 1.5)
    beta = 0.1 * jax.random.normal(ks[1], (n_bn, hidden), jnp.float32)
    r_mean = 0.1 * jax.random.normal(ks[2], (n_bn, hidden), jnp.float32)
    r_var = jax.random.uniform(ks[3], (n_bn, hidden), jnp.float32, 0.5, 1.5)
    scales = gamma / jnp.sqrt(r_var + eps)        # eval-mode BN as scale/shift
    shifts = beta - r_mean * scales

    params = dict(
        scales=scales, shifts=shifts,
        # Conv2d(hidden->hidden, k=3) weight stored HWIO: (3, 3, Cin, Cout)
        w1=0.1 * jax.random.normal(ks[4], (3, 3, hidden, hidden), jnp.float32),
    )
    if upsample:
        # ConvTranspose2d(hidden->output, k=3) weight, torch layout
        # (Cin, Cout, kh, kw) rearranged to (kh, kw, Cin, Cout) (NOT flipped).
        params["wt2"] = 0.1 * jax.random.normal(
            ks[5], (3, 3, hidden, output), jnp.float32)
        # ConvTranspose2d(hidden->output, k=1) weight: (Cin, Cout)
        params["wup"] = 0.1 * jax.random.normal(
            ks[6], (hidden, output), jnp.float32)
    else:
        params["w2"] = 0.1 * jax.random.normal(
            ks[5], (3, 3, hidden, output), jnp.float32)
    return params


# ----------------------------------------------------------------------------
# Pure-JAX reference (f32, HIGHEST precision) for correctness check
# ----------------------------------------------------------------------------
def reference_nchw(x_nchw, params, upsample):
    x = jnp.transpose(x_nchw, (0, 2, 3, 1)).astype(jnp.float32)
    dn = ("NHWC", "HWIO", "NHWC")
    hi = lax.Precision.HIGHEST
    sc, sh = params["scales"], params["shifts"]

    y1 = jnp.maximum(x * sc[0] + sh[0], 0.0)
    z = lax.conv_general_dilated(y1, params["w1"], (1, 1), "SAME",
                                 dimension_numbers=dn, precision=hi)
    y2 = jnp.maximum(z * sc[1] + sh[1], 0.0)
    if not upsample:
        o = lax.conv_general_dilated(y2, params["w2"], (1, 1), "SAME",
                                     dimension_numbers=dn, precision=hi)
        o = o + x
    else:
        wflip = params["wt2"][::-1, ::-1]         # conv-equivalent of ConvT k=3
        o = lax.conv_general_dilated(y2, wflip, (1, 1), [(1, 2), (1, 2)],
                                     lhs_dilation=(2, 2),
                                     dimension_numbers=dn, precision=hi)
        y3 = jnp.maximum(x * sc[2] + sh[2], 0.0)
        idu = lax.conv_general_dilated(y3, params["wup"][None, None], (1, 1),
                                       [(0, 1), (0, 1)], lhs_dilation=(2, 2),
                                       dimension_numbers=dn, precision=hi)
        o = o + idu
    return jnp.transpose(o, (0, 3, 1, 2))


# ----------------------------------------------------------------------------
if __name__ == "__main__":
    key = jax.random.PRNGKey(0)
    k_x1, k_p1, k_x2, k_p2 = jax.random.split(key, 4)

    # Tolerance: bf16 activations end-to-end (input, MXU operands, output)
    # against an f32 HIGHEST-precision reference.
    rtol = atol = 4e-2

    def to_np(a):
        return np.asarray(a.astype(jnp.float32))

    # Case 1: upsample=False, folded lane-dense store, 2 row tiles (halo path).
    hidden, output = 8, 8
    x1 = jax.random.normal(k_x1, (2, hidden, 16, 16), jnp.float32)   # NCHW
    p1 = make_params(k_p1, hidden, output, upsample=False)
    ref1 = reference_nchw(x1, p1, upsample=False)
    out1 = jax.block_until_ready(
        decoder_residual_layer(x1, p1, upsample=False, row_tile=8))
    assert out1.shape == (2, 8, 16, 16)
    np.testing.assert_allclose(to_np(out1), np.asarray(ref1),
                               rtol=rtol, atol=atol)

    # Case 1b: natural (unfolded) NHWC store path + auto row-tile selection.
    out1b = jax.block_until_ready(
        decoder_residual_layer(x1, p1, upsample=False, fold_lanes=False))
    np.testing.assert_allclose(to_np(out1b), np.asarray(ref1),
                               rtol=rtol, atol=atol)

    # Case 2: upsample=True (spatial 8 -> 16, channels 8 -> 4), 2 row tiles.
    hidden, output = 8, 4
    x2 = jax.random.normal(k_x2, (2, hidden, 8, 8), jnp.float32)     # NCHW
    p2 = make_params(k_p2, hidden, output, upsample=True)
    ref2 = reference_nchw(x2, p2, upsample=True)
    out2 = jax.block_until_ready(
        decoder_residual_layer(x2, p2, upsample=True, row_tile=4))
    assert out2.shape == (2, 4, 16, 16)
    np.testing.assert_allclose(to_np(out2), np.asarray(ref2),
                               rtol=rtol, atol=atol)

    # Case 2b: parity-plane (unfolded) store path, smaller row tiles.
    out2b = jax.block_until_ready(
        decoder_residual_layer(x2, p2, upsample=True, fold_lanes=False,
                               row_tile=2))
    np.testing.assert_allclose(to_np(out2b), np.asarray(ref2),
                               rtol=rtol, atol=atol)

    print("KERNEL_OK")
</pallas_src>

<mosaic_0001>
module attributes {stable_mosaic.version = 11 : i64} {
  func.func @_decoder_res_kernel(%arg0: i32, %arg1: i32, %arg2: memref<1x1x12x16x8xbf16, #tpu.memory_space<vmem>>, %arg3: memref<2x8xf32, #tpu.memory_space<vmem>>, %arg4: memref<2x8xf32, #tpu.memory_space<vmem>>, %arg5: memref<3x24x8xbf16, #tpu.memory_space<vmem>>, %arg6: memref<3x24x8xbf16, #tpu.memory_space<vmem>>, %arg7: memref<1x1x8x128xbf16, #tpu.memory_space<vmem>>) attributes {dimension_semantics = [#tpu.dimension_semantics<parallel>, #tpu.dimension_semantics<parallel>], iteration_bounds = array<i64: 2, 2>, scalar_prefetch = 0 : i64, scratch_operands = 0 : i64, tpu.core_type = #tpu.core_type<tc>, window_params = [{transform_indices = @transform_0, window_bounds = array<i64: 1, 1, 12, 16, 8>}, {pipeline_mode = #tpu.pipeline_mode<synchronous>, transform_indices = @transform_1, window_bounds = array<i64: 2, 8>}, {pipeline_mode = #tpu.pipeline_mode<synchronous>, transform_indices = @transform_2, window_bounds = array<i64: 2, 8>}, {pipeline_mode = #tpu.pipeline_mode<synchronous>, transform_indices = @transform_3, window_bounds = array<i64: 3, 24, 8>}, {pipeline_mode = #tpu.pipeline_mode<synchronous>, transform_indices = @transform_4, window_bounds = array<i64: 3, 24, 8>}, {transform_indices = @transform_5, window_bounds = array<i64: 1, 1, 8, 128>}]} {
    %0 = tpu.iota {dimensions = array<i32: 0>} : vector<12x1x1xi32>
    %c8_i32 = arith.constant 8 : i32
    %1 = arith.muli %arg1, %c8_i32 : i32
    %2 = vector.broadcast %1 : i32 to vector<12x1x1xi32>
    %3 = arith.addi %0, %2 : vector<12x1x1xi32>
    %c2_i32 = arith.constant 2 : i32
    %4 = vector.broadcast %c2_i32 : i32 to vector<12x1x1xi32>
    %5 = arith.subi %3, %4 : vector<12x1x1xi32>
    %c0_i32 = arith.constant 0 : i32
    %6 = vector.broadcast %c0_i32 : i32 to vector<12x1x1xi32>
    %7 = arith.cmpi sge, %5, %6 : vector<12x1x1xi32>
    %c16_i32 = arith.constant 16 : i32
    %8 = vector.broadcast %c16_i32 : i32 to vector<12x1x1xi32>
    %9 = arith.cmpi slt, %5, %8 : vector<12x1x1xi32>
    %10 = arith.andi %7, %9 : vector<12x1x1xi1>
    %11 = arith.extui %10 : vector<12x1x1xi1> to vector<12x1x1xi32>
    %12 = arith.sitofp %11 : vector<12x1x1xi32> to vector<12x1x1xf32>
    %c0 = arith.constant 0 : index
    %c0_0 = arith.constant 0 : index
    %c0_1 = arith.constant 0 : index
    %c0_2 = arith.constant 0 : index
    %c0_3 = arith.constant 0 : index
    %13 = vector.load %arg2[%c0, %c0_0, %c0_1, %c0_2, %c0_3] : memref<1x1x12x16x8xbf16, #tpu.memory_space<vmem>>, vector<1x1x12x16x8xbf16>
    %14 = vector.shape_cast %13 : vector<1x1x12x16x8xbf16> to vector<12x16x8xbf16>
    %15 = arith.extf %14 : vector<12x16x8xbf16> to vector<12x16x8xf32>
    %c0_4 = arith.constant 0 : index
    %c0_5 = arith.constant 0 : index
    %16 = vector.load %arg3[%c0_4, %c0_5] : memref<2x8xf32, #tpu.memory_space<vmem>>, vector<1x8xf32>
    %17 = vector.shape_cast %16 : vector<1x8xf32> to vector<8xf32>
    %c0_6 = arith.constant 0 : index
    %c0_7 = arith.constant 0 : index
    %18 = vector.load %arg4[%c0_6, %c0_7] : memref<2x8xf32, #tpu.memory_space<vmem>>, vector<1x8xf32>
    %19 = vector.shape_cast %18 : vector<1x8xf32> to vector<8xf32>
    %20 = vector.shape_cast %17 : vector<8xf32> to vector<1x1x8xf32>
    %21 = vector.broadcast %20 : vector<1x1x8xf32> to vector<12x16x8xf32>
    %22 = arith.mulf %15, %21 : vector<12x16x8xf32>
    %23 = vector.shape_cast %19 : vector<8xf32> to vector<1x1x8xf32>
    %24 = vector.broadcast %23 : vector<1x1x8xf32> to vector<12x16x8xf32>
    %25 = arith.addf %22, %24 : vector<12x16x8xf32>
    %cst = arith.constant 0.000000e+00 : f32
    %26 = vector.broadcast %cst : f32 to vector<12x16x8xf32>
    %27 = arith.maximumf %25, %26 : vector<12x16x8xf32>
    %28 = vector.broadcast %12 : vector<12x1x1xf32> to vector<12x16x8xf32>
    %29 = arith.mulf %27, %28 : vector<12x16x8xf32>
    %30 = arith.truncf %29 : vector<12x16x8xf32> to vector<12x16x8xbf16>
    %cst_8 = arith.constant 0.000000e+00 : bf16
    %31 = vector.broadcast %cst_8 : bf16 to vector<1x16x8xbf16>
    %32 = vector.extract_strided_slice %30 {offsets = [0, 0, 0], sizes = [11, 16, 8], strides = [1, 1, 1]} : vector<12x16x8xbf16> to vector<11x16x8xbf16>
    %33 = tpu.concatenate %31, %32 in 0 : vector<1x16x8xbf16>, vector<11x16x8xbf16> -> vector<12x16x8xbf16>
    %cst_9 = arith.constant 0.000000e+00 : bf16
    %34 = vector.broadcast %cst_9 : bf16 to vector<1x16x8xbf16>
    %35 = vector.extract_strided_slice %30 {offsets = [1, 0, 0], sizes = [11, 16, 8], strides = [1, 1, 1]} : vector<12x16x8xbf16> to vector<11x16x8xbf16>
    %36 = tpu.concatenate %35, %34 in 0 : vector<11x16x8xbf16>, vector<1x16x8xbf16> -> vector<12x16x8xbf16>
    %cst_10 = arith.constant 0.000000e+00 : bf16
    %37 = vector.broadcast %cst_10 : bf16 to vector<12x1x8xbf16>
    %38 = vector.extract_strided_slice %33 {offsets = [0, 0, 0], sizes = [12, 15, 8], strides = [1, 1, 1]} : vector<12x16x8xbf16> to vector<12x15x8xbf16>
    %39 = tpu.concatenate %37, %38 in 1 : vector<12x1x8xbf16>, vector<12x15x8xbf16> -> vector<12x16x8xbf16>
    %cst_11 = arith.constant 0.000000e+00 : bf16
    %40 = vector.broadcast %cst_11 : bf16 to vector<12x1x8xbf16>
    %41 = vector.extract_strided_slice %33 {offsets = [0, 1, 0], sizes = [12, 15, 8], strides = [1, 1, 1]} : vector<12x16x8xbf16> to vector<12x15x8xbf16>
    %42 = tpu.concatenate %41, %40 in 1 : vector<12x15x8xbf16>, vector<12x1x8xbf16> -> vector<12x16x8xbf16>
    %43 = tpu.concatenate %39, %33, %42 in 2 : vector<12x16x8xbf16>, vector<12x16x8xbf16>, vector<12x16x8xbf16> -> vector<12x16x24xbf16>
    %44 = vector.shape_cast %43 : vector<12x16x24xbf16> to vector<192x24xbf16>
    %c0_12 = arith.constant 0 : index
    %c0_13 = arith.constant 0 : index
    %c0_14 = arith.constant 0 : index
    %45 = vector.load %arg5[%c0_12, %c0_13, %c0_14] : memref<3x24x8xbf16, #tpu.memory_space<vmem>>, vector<1x24x8xbf16>
    %46 = vector.shape_cast %45 : vector<1x24x8xbf16> to vector<24x8xbf16>
    %cst_15 = arith.constant dense<0.000000e+00> : vector<192x8xf32>
    %47 = tpu.matmul %44, %46, %cst_15 {dimension_numbers = #tpu.dot_dimension_numbers<[1], [0], [0], [1], [0, 0, 1, 1], [], []>} : vector<192x24xbf16>, vector<24x8xbf16>, vector<192x8xf32> -> vector<192x8xf32>
    %cst_16 = arith.constant 0.000000e+00 : bf16
    %48 = vector.broadcast %cst_16 : bf16 to vector<12x1x8xbf16>
    %49 = vector.extract_strided_slice %30 {offsets = [0, 0, 0], sizes = [12, 15, 8], strides = [1, 1, 1]} : vector<12x16x8xbf16> to vector<12x15x8xbf16>
    %50 = tpu.concatenate %48, %49 in 1 : vector<12x1x8xbf16>, vector<12x15x8xbf16> -> vector<12x16x8xbf16>
    %cst_17 = arith.constant 0.000000e+00 : bf16
    %51 = vector.broadcast %cst_17 : bf16 to vector<12x1x8xbf16>
    %52 = vector.extract_strided_slice %30 {offsets = [0, 1, 0], sizes = [12, 15, 8], strides = [1, 1, 1]} : vector<12x16x8xbf16> to vector<12x15x8xbf16>
    %53 = tpu.concatenate %52, %51 in 1 : vector<12x15x8xbf16>, vector<12x1x8xbf16> -> vector<12x16x8xbf16>
    %54 = tpu.concatenate %50, %30, %53 in 2 : vector<12x16x8xbf16>, vector<12x16x8xbf16>, vector<12x16x8xbf16> -> vector<12x16x24xbf16>
    %55 = vector.shape_cast %54 : vector<12x16x24xbf16> to vector<192x24xbf16>
    %c1 = arith.constant 1 : index
    %c0_18 = arith.constant 0 : index
    %c0_19 = arith.constant 0 : index
    %56 = vector.load %arg5[%c1, %c0_18, %c0_19] : memref<3x24x8xbf16, #tpu.memory_space<vmem>>, vector<1x24x8xbf16>
    %57 = vector.shape_cast %56 : vector<1x24x8xbf16> to vector<24x8xbf16>
    %cst_20 = arith.constant dense<0.000000e+00> : vector<192x8xf32>
    %58 = tpu.matmul %55, %57, %cst_20 {dimension_numbers = #tpu.dot_dimension_numbers<[1], [0], [0], [1], [0, 0, 1, 1], [], []>} : vector<192x24xbf16>, vector<24x8xbf16>, vector<192x8xf32> -> vector<192x8xf32>
    %59 = arith.addf %47, %58 : vector<192x8xf32>
    %cst_21 = arith.constant 0.000000e+00 : bf16
    %60 = vector.broadcast %cst_21 : bf16 to vector<12x1x8xbf16>
    %61 = vector.extract_strided_slice %36 {offsets = [0, 0, 0], sizes = [12, 15, 8], strides = [1, 1, 1]} : vector<12x16x8xbf16> to vector<12x15x8xbf16>
    %62 = tpu.concatenate %60, %61 in 1 : vector<12x1x8xbf16>, vector<12x15x8xbf16> -> vector<12x16x8xbf16>
    %cst_22 = arith.constant 0.000000e+00 : bf16
    %63 = vector.broadcast %cst_22 : bf16 to vector<12x1x8xbf16>
    %64 = vector.extract_strided_slice %36 {offsets = [0, 1, 0], sizes = [12, 15, 8], strides = [1, 1, 1]} : vector<12x16x8xbf16> to vector<12x15x8xbf16>
    %65 = tpu.concatenate %64, %63 in 1 : vector<12x15x8xbf16>, vector<12x1x8xbf16> -> vector<12x16x8xbf16>
    %66 = tpu.concatenate %62, %36, %65 in 2 : vector<12x16x8xbf16>, vector<12x16x8xbf16>, vector<12x16x8xbf16> -> vector<12x16x24xbf16>
    %67 = vector.shape_cast %66 : vector<12x16x24xbf16> to vector<192x24xbf16>
    %c2 = arith.constant 2 : index
    %c0_23 = arith.constant 0 : index
    %c0_24 = arith.constant 0 : index
    %68 = vector.load %arg5[%c2, %c0_23, %c0_24] : memref<3x24x8xbf16, #tpu.memory_space<vmem>>, vector<1x24x8xbf16>
    %69 = vector.shape_cast %68 : vector<1x24x8xbf16> to vector<24x8xbf16>
    %cst_25 = arith.constant dense<0.000000e+00> : vector<192x8xf32>
    %70 = tpu.matmul %67, %69, %cst_25 {dimension_numbers = #tpu.dot_dimension_numbers<[1], [0], [0], [1], [0, 0, 1, 1], [], []>} : vector<192x24xbf16>, vector<24x8xbf16>, vector<192x8xf32> -> vector<192x8xf32>
    %71 = arith.addf %59, %70 : vector<192x8xf32>
    %72 = vector.shape_cast %71 : vector<192x8xf32> to vector<12x16x8xf32>
    %c1_26 = arith.constant 1 : index
    %c0_27 = arith.constant 0 : index
    %73 = vector.load %arg3[%c1_26, %c0_27] : memref<2x8xf32, #tpu.memory_space<vmem>>, vector<1x8xf32>
    %74 = vector.shape_cast %73 : vector<1x8xf32> to vector<8xf32>
    %c1_28 = arith.constant 1 : index
    %c0_29 = arith.constant 0 : index
    %75 = vector.load %arg4[%c1_28, %c0_29] : memref<2x8xf32, #tpu.memory_space<vmem>>, vector<1x8xf32>
    %76 = vector.shape_cast %75 : vector<1x8xf32> to vector<8xf32>
    %77 = vector.shape_cast %74 : vector<8xf32> to vector<1x1x8xf32>
    %78 = vector.broadcast %77 : vector<1x1x8xf32> to vector<12x16x8xf32>
    %79 = arith.mulf %72, %78 : vector<12x16x8xf32>
    %80 = vector.shape_cast %76 : vector<8xf32> to vector<1x1x8xf32>
    %81 = vector.broadcast %80 : vector<1x1x8xf32> to vector<12x16x8xf32>
    %82 = arith.addf %79, %81 : vector<12x16x8xf32>
    %cst_30 = arith.constant 0.000000e+00 : f32
    %83 = vector.broadcast %cst_30 : f32 to vector<12x16x8xf32>
    %84 = arith.maximumf %82, %83 : vector<12x16x8xf32>
    %85 = vector.broadcast %12 : vector<12x1x1xf32> to vector<12x16x8xf32>
    %86 = arith.mulf %84, %85 : vector<12x16x8xf32>
    %87 = arith.truncf %86 : vector<12x16x8xf32> to vector<12x16x8xbf16>
    %cst_31 = arith.constant 0.000000e+00 : bf16
    %88 = vector.broadcast %cst_31 : bf16 to vector<1x16x8xbf16>
    %89 = vector.extract_strided_slice %87 {offsets = [0, 0, 0], sizes = [11, 16, 8], strides = [1, 1, 1]} : vector<12x16x8xbf16> to vector<11x16x8xbf16>
    %90 = tpu.concatenate %88, %89 in 0 : vector<1x16x8xbf16>, vector<11x16x8xbf16> -> vector<12x16x8xbf16>
    %cst_32 = arith.constant 0.000000e+00 : bf16
    %91 = vector.broadcast %cst_32 : bf16 to vector<1x16x8xbf16>
    %92 = vector.extract_strided_slice %87 {offsets = [1, 0, 0], sizes = [11, 16, 8], strides = [1, 1, 1]} : vector<12x16x8xbf16> to vector<11x16x8xbf16>
    %93 = tpu.concatenate %92, %91 in 0 : vector<11x16x8xbf16>, vector<1x16x8xbf16> -> vector<12x16x8xbf16>
    %cst_33 = arith.constant 0.000000e+00 : bf16
    %94 = vector.broadcast %cst_33 : bf16 to vector<12x1x8xbf16>
    %95 = vector.extract_strided_slice %90 {offsets = [0, 0, 0], sizes = [12, 15, 8], strides = [1, 1, 1]} : vector<12x16x8xbf16> to vector<12x15x8xbf16>
    %96 = tpu.concatenate %94, %95 in 1 : vector<12x1x8xbf16>, vector<12x15x8xbf16> -> vector<12x16x8xbf16>
    %cst_34 = arith.constant 0.000000e+00 : bf16
    %97 = vector.broadcast %cst_34 : bf16 to vector<12x1x8xbf16>
    %98 = vector.extract_strided_slice %90 {offsets = [0, 1, 0], sizes = [12, 15, 8], strides = [1, 1, 1]} : vector<12x16x8xbf16> to vector<12x15x8xbf16>
    %99 = tpu.concatenate %98, %97 in 1 : vector<12x15x8xbf16>, vector<12x1x8xbf16> -> vector<12x16x8xbf16>
    %100 = tpu.concatenate %96, %90, %99 in 2 : vector<12x16x8xbf16>, vector<12x16x8xbf16>, vector<12x16x8xbf16> -> vector<12x16x24xbf16>
    %101 = vector.shape_cast %100 : vector<12x16x24xbf16> to vector<192x24xbf16>
    %c0_35 = arith.constant 0 : index
    %c0_36 = arith.constant 0 : index
    %c0_37 = arith.constant 0 : index
    %102 = vector.load %arg6[%c0_35, %c0_36, %c0_37] : memref<3x24x8xbf16, #tpu.memory_space<vmem>>, vector<1x24x8xbf16>
    %103 = vector.shape_cast %102 : vector<1x24x8xbf16> to vector<24x8xbf16>
    %cst_38 = arith.constant dense<0.000000e+00> : vector<192x8xf32>
    %104 = tpu.matmul %101, %103, %cst_38 {dimension_numbers = #tpu.dot_dimension_numbers<[1], [0], [0], [1], [0, 0, 1, 1], [], []>} : vector<192x24xbf16>, vector<24x8xbf16>, vector<192x8xf32> -> vector<192x8xf32>
    %cst_39 = arith.constant 0.000000e+00 : bf16
    %105 = vector.broadcast %cst_39 : bf16 to vector<12x1x8xbf16>
    %106 = vector.extract_strided_slice %87 {offsets = [0, 0, 0], sizes = [12, 15, 8], strides = [1, 1, 1]} : vector<12x16x8xbf16> to vector<12x15x8xbf16>
    %107 = tpu.concatenate %105, %106 in 1 : vector<12x1x8xbf16>, vector<12x15x8xbf16> -> vector<12x16x8xbf16>
    %cst_40 = arith.constant 0.000000e+00 : bf16
    %108 = vector.broadcast %cst_40 : bf16 to vector<12x1x8xbf16>
    %109 = vector.extract_strided_slice %87 {offsets = [0, 1, 0], sizes = [12, 15, 8], strides = [1, 1, 1]} : vector<12x16x8xbf16> to vector<12x15x8xbf16>
    %110 = tpu.concatenate %109, %108 in 1 : vector<12x15x8xbf16>, vector<12x1x8xbf16> -> vector<12x16x8xbf16>
    %111 = tpu.concatenate %107, %87, %110 in 2 : vector<12x16x8xbf16>, vector<12x16x8xbf16>, vector<12x16x8xbf16> -> vector<12x16x24xbf16>
    %112 = vector.shape_cast %111 : vector<12x16x24xbf16> to vector<192x24xbf16>
    %c1_41 = arith.constant 1 : index
    %c0_42 = arith.constant 0 : index
    %c0_43 = arith.constant 0 : index
    %113 = vector.load %arg6[%c1_41, %c0_42, %c0_43] : memref<3x24x8xbf16, #tpu.memory_space<vmem>>, vector<1x24x8xbf16>
    %114 = vector.shape_cast %113 : vector<1x24x8xbf16> to vector<24x8xbf16>
    %cst_44 = arith.constant dense<0.000000e+00> : vector<192x8xf32>
    %115 = tpu.matmul %112, %114, %cst_44 {dimension_numbers = #tpu.dot_dimension_numbers<[1], [0], [0], [1], [0, 0, 1, 1], [], []>} : vector<192x24xbf16>, vector<24x8xbf16>, vector<192x8xf32> -> vector<192x8xf32>
    %116 = arith.addf %104, %115 : vector<192x8xf32>
    %cst_45 = arith.constant 0.000000e+00 : bf16
    %117 = vector.broadcast %cst_45 : bf16 to vector<12x1x8xbf16>
    %118 = vector.extract_strided_slice %93 {offsets = [0, 0, 0], sizes = [12, 15, 8], strides = [1, 1, 1]} : vector<12x16x8xbf16> to vector<12x15x8xbf16>
    %119 = tpu.concatenate %117, %118 in 1 : vector<12x1x8xbf16>, vector<12x15x8xbf16> -> vector<12x16x8xbf16>
    %cst_46 = arith.constant 0.000000e+00 : bf16
    %120 = vector.broadcast %cst_46 : bf16 to vector<12x1x8xbf16>
    %121 = vector.extract_strided_slice %93 {offsets = [0, 1, 0], sizes = [12, 15, 8], strides = [1, 1, 1]} : vector<12x16x8xbf16> to vector<12x15x8xbf16>
    %122 = tpu.concatenate %121, %120 in 1 : vector<12x15x8xbf16>, vector<12x1x8xbf16> -> vector<12x16x8xbf16>
    %123 = tpu.concatenate %119, %93, %122 in 2 : vector<12x16x8xbf16>, vector<12x16x8xbf16>, vector<12x16x8xbf16> -> vector<12x16x24xbf16>
    %124 = vector.shape_cast %123 : vector<12x16x24xbf16> to vector<192x24xbf16>
    %c2_47 = arith.constant 2 : index
    %c0_48 = arith.constant 0 : index
    %c0_49 = arith.constant 0 : index
    %125 = vector.load %arg6[%c2_47, %c0_48, %c0_49] : memref<3x24x8xbf16, #tpu.memory_space<vmem>>, vector<1x24x8xbf16>
    %126 = vector.shape_cast %125 : vector<1x24x8xbf16> to vector<24x8xbf16>
    %cst_50 = arith.constant dense<0.000000e+00> : vector<192x8xf32>
    %127 = tpu.matmul %124, %126, %cst_50 {dimension_numbers = #tpu.dot_dimension_numbers<[1], [0], [0], [1], [0, 0, 1, 1], [], []>} : vector<192x24xbf16>, vector<24x8xbf16>, vector<192x8xf32> -> vector<192x8xf32>
    %128 = arith.addf %116, %127 : vector<192x8xf32>
    %129 = vector.shape_cast %128 : vector<192x8xf32> to vector<12x16x8xf32>
    %130 = vector.extract_strided_slice %129 {offsets = [2, 0, 0], sizes = [8, 16, 8], strides = [1, 1, 1]} : vector<12x16x8xf32> to vector<8x16x8xf32>
    %131 = vector.extract_strided_slice %15 {offsets = [2, 0, 0], sizes = [8, 16, 8], strides = [1, 1, 1]} : vector<12x16x8xf32> to vector<8x16x8xf32>
    %132 = arith.addf %130, %131 : vector<8x16x8xf32>
    %133 = arith.truncf %132 : vector<8x16x8xf32> to vector<8x16x8xbf16>
    %134 = vector.shape_cast %133 : vector<8x16x8xbf16> to vector<8x128xbf16>
    %c0_51 = arith.constant 0 : index
    %c0_52 = arith.constant 0 : index
    %c0_53 = arith.constant 0 : index
    %c0_54 = arith.constant 0 : index
    %135 = vector.load %arg7[%c0_51, %c0_52, %c0_53, %c0_54] : memref<1x1x8x128xbf16, #tpu.memory_space<vmem>>, vector<1x1x8x128xbf16>
    %136 = vector.shape_cast %135 : vector<1x1x8x128xbf16> to vector<8x128xbf16>
    %137 = vector.shape_cast %134 : vector<8x128xbf16> to vector<1x1x8x128xbf16>
    tpu.vector_store %arg7[%c0_51, %c0_52, %c0_53, %c0_54], %137 {strides = array<i32>} : memref<1x1x8x128xbf16, #tpu.memory_space<vmem>>, vector<1x1x8x128xbf16>,
    return
  }
  func.func @transform_0(%arg0: i32, %arg1: i32) -> (i32, i32, i32, i32, i32) {
    %c0_i32 = arith.constant 0 : i32
    %c0_i32_0 = arith.constant 0 : i32
    %c0_i32_1 = arith.constant 0 : i32
    %c0_i32_2 = arith.constant 0 : i32
    return %arg0, %arg1, %c0_i32, %c0_i32_0, %c0_i32_1 : i32, i32, i32, i32, i32
  }
  func.func @transform_1(%arg0: i32, %arg1: i32) -> (i32, i32) {
    %c0_i32 = arith.constant 0 : i32
    %c0_i32_0 = arith.constant 0 : i32
    %c0_i32_1 = arith.constant 0 : i32
    return %c0_i32, %c0_i32_0 : i32, i32
  }
  func.func @transform_2(%arg0: i32, %arg1: i32) -> (i32, i32) {
    %c0_i32 = arith.constant 0 : i32
    %c0_i32_0 = arith.constant 0 : i32
    %c0_i32_1 = arith.constant 0 : i32
    return %c0_i32, %c0_i32_0 : i32, i32
  }
  func.func @transform_3(%arg0: i32, %arg1: i32) -> (i32, i32, i32) {
    %c0_i32 = arith.constant 0 : i32
    %c0_i32_0 = arith.constant 0 : i32
    %c0_i32_1 = arith.constant 0 : i32
    %c0_i32_2 = arith.constant 0 : i32
    return %c0_i32, %c0_i32_0, %c0_i32_1 : i32, i32, i32
  }
  func.func @transform_4(%arg0: i32, %arg1: i32) -> (i32, i32, i32) {
    %c0_i32 = arith.constant 0 : i32
    %c0_i32_0 = arith.constant 0 : i32
    %c0_i32_1 = arith.constant 0 : i32
    %c0_i32_2 = arith.constant 0 : i32
    return %c0_i32, %c0_i32_0, %c0_i32_1 : i32, i32, i32
  }
  func.func @transform_5(%arg0: i32, %arg1: i32) -> (i32, i32, i32, i32) {
    %c0_i32 = arith.constant 0 : i32
    %c0_i32_0 = arith.constant 0 : i32
    %c0_i32_1 = arith.constant 0 : i32
    return %arg0, %arg1, %c0_i32, %c0_i32_0 : i32, i32, i32, i32
  }
}

</mosaic_0001>

<llo_original>
// kernel: tpu_custom_call.1
$region0: #{tpu_custom_call.1}
  #allocation0 [shape = 'u32[]', space=smem, size = 0x4, offset = 0x4, fixed_abs, tag = 'smem constant byte address 0x4 - core index']
  #allocation1 [shape = 'u32[144,128]{1,0:T(1,128)}', space=vmem, size = 0x12000, scoped, tag = 'internal scratch']
  %s0 = inlined_call_operand.vmem [shape: bf16[2,2,12,16,8], index: 0, kind: input, shape index: {}]
  %s1 = inlined_call_operand.vmem [shape: f32[2,8], index: 1, kind: input, shape index: {}]
  %s2 = inlined_call_operand.vmem [shape: f32[2,8], index: 2, kind: input, shape index: {}]
  %s3 = inlined_call_operand.vmem [shape: bf16[3,24,8], index: 3, kind: input, shape index: {}]
  %s4 = inlined_call_operand.vmem [shape: bf16[3,24,8], index: 4, kind: input, shape index: {}]
  %s5 = inlined_call_operand.hbm [shape: bf16[2,2,8,128], index: 5, kind: output, shape index: {}]
  %s6 = sld [smem:[#allocation0]]
  $region53: #{tpu_custom_call.1} parent=0
    _
  %s8 = ssub.s32 1, %s6
  %s9 = scalar_select 0, %s8, %s6
  $region1: #{tpu_custom_call.1} parent=0
    #allocation2 [shape = 'u8[4096]{0}', space=vmem, size = 0x1000, scoped, tag = 'output window, operand 0']
    #allocation3 [shape = 's32[2]{0}', space=sflag, size = 0x8, scoped, tag = 'scoped memory for tpu_custom_call.1']
    %10 = vsyncpa [#allocation3], 0
    %s11 = scalar_lea.sflag [#allocation3], 1
    %12 = vsyncpa %s11, 0
    loop: start=0, step=1, limit=6
    $region2: #{tpu_custom_call.1} parent=1 // loop_pre_header
      _
    $region3: #{tpu_custom_call.1} parent=1 // loop_header
      %s14 = sphi 0, %s18
      %p15 = scmp.ge.s32.totalorder %s14, 6
      %s21 = sphi 0, %s33
      %s22 = sphi 0, %s29
      %s23 = sphi 0, %s21
      %s24 = sphi 0, %s22
      %s25 = sphi 0, %s23
      %s26 = sphi 0, %s24
      %s38 = sphi 0, %s40
      %s41 = sphi 0, %s38
      %s42 = sphi 0, %s41
      %s58 = sphi 0, %s42
      %s62 = sphi 0, %s62
      %s64 = sphi 0, %s62
      %s65 = sphi 0, %s64
      %s79 = sphi 0, %s65
      %s83 = sphi 0, %s83
      %s85 = sphi 0, %s83
      %s86 = sphi 0, %s85
      %s100 = sphi 0, %s86
      %s104 = sphi 0, %s104
      %s106 = sphi 0, %s104
      %s107 = sphi 0, %s106
      %s121 = sphi 0, %s107
      %s125 = sphi 0, %s125
      %s127 = sphi 0, %s125
      %s128 = sphi 0, %s127
      %s142 = sphi 0, %s128
      %s150 = sphi 0, %s152
      %s153 = sphi 0, %s150
      %s154 = sphi 0, %s153
      %s170 = sphi 0, %s154
    $region4: #{tpu_custom_call.1} parent=1 // loop_header_branch
      %17 = sbr.rel (%p15) target = $region8
    $region5: #{tpu_custom_call.1} parent=1 // loop_body
      %s19 = ssub.s32 %s14, 1
      %s20 = ssub.s32 %s14, 2
      %s27 = sadd.s32 1, %s22
      %p28 = scmp.ge.s32.totalorder %s27, 2
      %s29 = scalar_select %p28, 0, %s27
      %s30 = sadd.s32 1, %s21
      %s31 = scalar_select %p28, %s30, %s21
      %p32 = scmp.ge.s32.totalorder %s31, 2
      %s33 = scalar_select %p32, 0, %s31
      %s34 = ssub.s32 %s21, %s33
      %s35 = ssub.s32 %s22, %s29
      %s36 = sor.u32 %s34, %s35
      %p37 = scmp.eq.s32.totalorder %s36, 0
      %s39 = sadd.s32 %s38, 1
      %s40 = scalar_select %p37, %s38, %s39
      %p43 = pneg %p37
      %p44 = scmp.eq.s32.totalorder %s14, 3
      %p45 = por %p43, %p44
      %p46 = scmp.ne.s32.totalorder %s38, %s41
      %p47 = scmp.eq.s32.totalorder %s14, 0
      %p48 = por %p46, %p47
      %p49 = scmp.ne.s32.totalorder %s38, %s41
      %p50 = scmp.eq.s32.totalorder %s19, 3
      %p51 = por %p49, %p50
      %p52 = scmp.ne.s32.totalorder %s41, %s42
      %p53 = scmp.eq.s32.totalorder %s19, 0
      %p54 = por %p52, %p53
      %p55 = scmp.ne.s32.totalorder %s41, %s42
      %p56 = scmp.eq.s32.totalorder %s20, 3
      %p57 = por %p55, %p56
      %p59 = scmp.ne.s32.totalorder %s42, %s58
      %p60 = scmp.eq.s32.totalorder %s20, 0
      %p61 = por %p59, %p60
      %s63 = sadd.s32 %s62, 1
      %p66 = scmp.eq.s32.totalorder %s14, 3
      %p67 = scmp.ne.s32.totalorder %s62, %s64
      %p68 = scmp.eq.s32.totalorder %s14, 0
      %p69 = por %p67, %p68
      %p70 = scmp.ne.s32.totalorder %s62, %s64
      %p71 = scmp.eq.s32.totalorder %s19, 3
      %p72 = por %p70, %p71
      %p73 = scmp.ne.s32.totalorder %s64, %s65
      %p74 = scmp.eq.s32.totalorder %s19, 0
      %p75 = por %p73, %p74
      %p76 = scmp.ne.s32.totalorder %s64, %s65
      %p77 = scmp.eq.s32.totalorder %s20, 3
      %p78 = por %p76, %p77
      %p80 = scmp.ne.s32.totalorder %s65, %s79
      %p81 = scmp.eq.s32.totalorder %s20, 0
      %p82 = por %p80, %p81
      %s84 = sadd.s32 %s83, 1
      %p87 = scmp.eq.s32.totalorder %s14, 3
      %p88 = scmp.ne.s32.totalorder %s83, %s85
      %p89 = scmp.eq.s32.totalorder %s14, 0
      %p90 = por %p88, %p89
      %p91 = scmp.ne.s32.totalorder %s83, %s85
      %p92 = scmp.eq.s32.totalorder %s19, 3
      %p93 = por %p91, %p92
      %p94 = scmp.ne.s32.totalorder %s85, %s86
      %p95 = scmp.eq.s32.totalorder %s19, 0
      %p96 = por %p94, %p95
      %p97 = scmp.ne.s32.totalorder %s85, %s86
      %p98 = scmp.eq.s32.totalorder %s20, 3
      %p99 = por %p97, %p98
      %p101 = scmp.ne.s32.totalorder %s86, %s100
      %p102 = scmp.eq.s32.totalorder %s20, 0
      %p103 = por %p101, %p102
      %s105 = sadd.s32 %s104, 1
      %p108 = scmp.eq.s32.totalorder %s14, 3
      %p109 = scmp.ne.s32.totalorder %s104, %s106
      %p110 = scmp.eq.s32.totalorder %s14, 0
      %p111 = por %p109, %p110
      %p112 = scmp.ne.s32.totalorder %s104, %s106
      %p113 = scmp.eq.s32.totalorder %s19, 3
      %p114 = por %p112, %p113
      %p115 = scmp.ne.s32.totalorder %s106, %s107
      %p116 = scmp.eq.s32.totalorder %s19, 0
      %p117 = por %p115, %p116
      %p118 = scmp.ne.s32.totalorder %s106, %s107
      %p119 = scmp.eq.s32.totalorder %s20, 3
      %p120 = por %p118, %p119
      %p122 = scmp.ne.s32.totalorder %s107, %s121
      %p123 = scmp.eq.s32.totalorder %s20, 0
      %p124 = por %p122, %p123
      %s126 = sadd.s32 %s125, 1
      %p129 = scmp.eq.s32.totalorder %s14, 3
      %p130 = scmp.ne.s32.totalorder %s125, %s127
      %p131 = scmp.eq.s32.totalorder %s14, 0
      %p132 = por %p130, %p131
      %p133 = scmp.ne.s32.totalorder %s125, %s127
      %p134 = scmp.eq.s32.totalorder %s19, 3
      %p135 = por %p133, %p134
      %p136 = scmp.ne.s32.totalorder %s127, %s128
      %p137 = scmp.eq.s32.totalorder %s19, 0
      %p138 = por %p136, %p137
      %p139 = scmp.ne.s32.totalorder %s127, %s128
      %p140 = scmp.eq.s32.totalorder %s20, 3
      %p141 = por %p139, %p140
      %p143 = scmp.ne.s32.totalorder %s128, %s142
      %p144 = scmp.eq.s32.totalorder %s20, 0
      %p145 = por %p143, %p144
      %s146 = ssub.s32 %s21, %s33
      %s147 = ssub.s32 %s22, %s29
      %s148 = sor.u32 %s146, %s147
      %p149 = scmp.eq.s32.totalorder %s148, 0
      %s151 = sadd.s32 %s150, 1
      %s152 = scalar_select %p149, %s150, %s151
      %p155 = pneg %p149
      %p156 = scmp.eq.s32.totalorder %s14, 3
      %p157 = por %p155, %p156
      %p158 = scmp.ne.s32.totalorder %s150, %s153
      %p159 = scmp.eq.s32.totalorder %s14, 0
      %p160 = por %p158, %p159
      %p161 = scmp.ne.s32.totalorder %s150, %s153
      %p162 = scmp.eq.s32.totalorder %s19, 3
      %p163 = por %p161, %p162
      %p164 = scmp.ne.s32.totalorder %s153, %s154
      %p165 = scmp.eq.s32.totalorder %s19, 0
      %p166 = por %p164, %p165
      %p167 = scmp.ne.s32.totalorder %s153, %s154
      %p168 = scmp.eq.s32.totalorder %s20, 3
      %p169 = por %p167, %p168
      %p171 = scmp.ne.s32.totalorder %s154, %s170
      %p172 = scmp.eq.s32.totalorder %s20, 0
      %p173 = por %p171, %p172
      %p174 = scmp.le.s32.totalorder 1, %s14
      %p175 = scmp.lt.s32.totalorder %s14, 5
      %p176 = pnand %p174, %p175
      %p177 = pneg %p176
      // Predicated region
      $region9: #{tpu_custom_call.1} parent=5 // pred_check
        _
      $region10: #{tpu_custom_call.1} parent=5 // pred_check_branch
        %179 = sbr.rel (%p176) target = $region12
      $region11: #{tpu_custom_call.1} parent=5 // pred_region
        %s180 = ssub.s32 %s14, 1
        // Predicated region
        $region13: #{tpu_custom_call.1} parent=11 // pred_check
          %p181 = pneg %p75
        $region14: #{tpu_custom_call.1} parent=11 // pred_check_branch
          %183 = sbr.rel (%p181) target = $region16
        $region15: #{tpu_custom_call.1} parent=11 // pred_region
          _
        $region16: #{tpu_custom_call.1} parent=11 // pred_fallthru
          _
        // Predicated region
        $region17: #{tpu_custom_call.1} parent=11 // pred_check
          %p184 = pneg %p96
        $region18: #{tpu_custom_call.1} parent=11 // pred_check_branch
          %186 = sbr.rel (%p184) target = $region20
        $region19: #{tpu_custom_call.1} parent=11 // pred_region
          _
        $region20: #{tpu_custom_call.1} parent=11 // pred_fallthru
          _
        // Predicated region
        $region21: #{tpu_custom_call.1} parent=11 // pred_check
          %p187 = pneg %p117
        $region22: #{tpu_custom_call.1} parent=11 // pred_check_branch
          %189 = sbr.rel (%p187) target = $region24
        $region23: #{tpu_custom_call.1} parent=11 // pred_region
          _
        $region24: #{tpu_custom_call.1} parent=11 // pred_fallthru
          _
        // Predicated region
        $region25: #{tpu_custom_call.1} parent=11 // pred_check
          %p190 = pneg %p138
        $region26: #{tpu_custom_call.1} parent=11 // pred_check_branch
          %192 = sbr.rel (%p190) target = $region28
        $region27: #{tpu_custom_call.1} parent=11 // pred_region
          _
        $region28: #{tpu_custom_call.1} parent=11 // pred_fallthru
          _
      $region12: #{tpu_custom_call.1} parent=5 // pred_fallthru
        _
      %p193 = scmp.lt.s32.totalorder %s14, 4
      // Predicated region
      $region29: #{tpu_custom_call.1} parent=5 // pred_check
        %p194 = pneg %p193
      $region30: #{tpu_custom_call.1} parent=5 // pred_check_branch
        %196 = sbr.rel (%p194) target = $region32
      $region31: #{tpu_custom_call.1} parent=5 // pred_region
        // Predicated region
        $region33: #{tpu_custom_call.1} parent=31 // pred_check
          %p197 = pneg %p48
        $region34: #{tpu_custom_call.1} parent=31 // pred_check_branch
          %199 = sbr.rel (%p197) target = $region36
        $region35: #{tpu_custom_call.1} parent=31 // pred_region
          %p200 = scmp.lt.s32.totalorder %s21, 1
          %s201 = scalar_select %p200, %s21, 1
          %p202 = scmp.lt.s32.totalorder %s22, 1
          %s203 = scalar_select %p202, %s22, 1
          %s204 = smul.addr %s203, 24
          %s205 = smul.addr %s201, 48
          %s206 = sadd.s32 %s204, %s205
          %s207 = smul.addr %s206, 4
          %s208 = scalar_lea.vmem %s0, %s207
        $region36: #{tpu_custom_call.1} parent=31 // pred_fallthru
          _
      $region32: #{tpu_custom_call.1} parent=5 // pred_fallthru
        _
      %p209 = scmp.le.s32.totalorder 1, %s14
      %p210 = scmp.lt.s32.totalorder %s14, 5
      %p211 = pnand %p209, %p210
      %p212 = pneg %p211
      // Predicated region
      $region37: #{tpu_custom_call.1} parent=5 // pred_check
        _
      $region38: #{tpu_custom_call.1} parent=5 // pred_check_branch
        %214 = sbr.rel (%p211) target = $region40
      $region39: #{tpu_custom_call.1} parent=5 // pred_region
        %s215 = ssub.s32 %s14, 1
        %p216 = scmp.lt.s32.totalorder %s23, 1
        %s217 = scalar_select %p216, %s23, 1
        %p218 = scmp.lt.s32.totalorder %s24, 1
        %s219 = scalar_select %p218, %s24, 1
        %s220 = smul.addr %s219, 24
        %s221 = smul.addr %s217, 48
        %s222 = sadd.s32 %s220, %s221
        %s223 = smul.addr %s222, 4
        %s224 = scalar_lea.vmem %s0, %s223
        %p225 = pneg %p54
        %p226 = pneg %p51
        %p227 = pneg %p75
        %p228 = pneg %p72
        %p229 = pneg %p96
        %p230 = pneg %p93
        %p231 = pneg %p117
        %p232 = pneg %p114
        %p233 = pneg %p138
        %p234 = pneg %p135
        %p235 = pneg %p166
        %p236 = pneg %p163
        %s237 = sand.u32 %s153, 1
        %s238 = scalar_lea.sflag [#allocation3], %s237
        %s239 = sand.u32 %s153, 1
        %s240 = smul.addr %s239, 4
        %s241 = scalar_lea.vmem [#allocation2], %s240
        %p242 = scmp.lt.s32.totalorder %s23, 1
        %s243 = scalar_select %p242, %s23, 1
        %p244 = scmp.lt.s32.totalorder %s24, 1
        %s245 = scalar_select %p244, %s24, 1
        %s246 = smul.addr %s245, 24
        %s247 = smul.addr %s243, 48
        %s248 = sadd.s32 %s246, %s247
        %s249 = smul.addr %s248, 4
        %s250 = scalar_lea.vmem %s0, %s249
        %s252 = smul.u32 %s24, 8
        %v253 = vstv %s252
        %v254 = vadd.s32 %v253, 1
        %v255 = vadd.s32 %v253, 3
        %v256 = vadd.s32 %v253, 4
        %v257 = vadd.s32 %v253, 5
        %v258 = vadd.s32 %v253, 6
        %v259 = vadd.s32 %v253, 7
        %v260 = vadd.s32 %v253, 8
        %v261 = vadd.s32 %v253, 9
        %v262 = vadd.s32 %v253, 10
        %v263 = vadd.s32 %v253, 11
        %v264 = vsub.s32 %v253, 2
        %v265 = vsub.s32 %v254, 2
        %v266 = vsub.s32 %v255, 2
        %v267 = vsub.s32 %v256, 2
        %v268 = vsub.s32 %v257, 2
        %v269 = vsub.s32 %v258, 2
        %v270 = vsub.s32 %v259, 2
        %v271 = vsub.s32 %v260, 2
        %v272 = vsub.s32 %v261, 2
        %v273 = vsub.s32 %v262, 2
        %v274 = vsub.s32 %v263, 2
        %vm275 = vcmp.ge.s32.totalorder %v264, 0
        %vm276 = vcmp.ge.s32.totalorder %v265, 0
        %vm277 = vcmp.ge.s32.totalorder %v253, 0
        %vm278 = vcmp.ge.s32.totalorder %v266, 0
        %vm279 = vcmp.ge.s32.totalorder %v267, 0
        %vm280 = vcmp.ge.s32.totalorder %v268, 0
        %vm281 = vcmp.ge.s32.totalorder %v269, 0
        %vm282 = vcmp.ge.s32.totalorder %v270, 0
        %vm283 = vcmp.ge.s32.totalorder %v271, 0
        %vm284 = vcmp.ge.s32.totalorder %v272, 0
        %vm285 = vcmp.ge.s32.totalorder %v273, 0
        %vm286 = vcmp.ge.s32.totalorder %v274, 0
        %vm287 = vcmp.lt.s32.totalorder %v264, 16
        %vm288 = vcmp.lt.s32.totalorder %v265, 16
        %vm289 = vcmp.lt.s32.totalorder %v253, 16
        %vm290 = vcmp.lt.s32.totalorder %v266, 16
        %vm291 = vcmp.lt.s32.totalorder %v267, 16
        %vm292 = vcmp.lt.s32.totalorder %v268, 16
        %vm293 = vcmp.lt.s32.totalorder %v269, 16
        %vm294 = vcmp.lt.s32.totalorder %v270, 16
        %vm295 = vcmp.lt.s32.totalorder %v271, 16
        %vm296 = vcmp.lt.s32.totalorder %v272, 16
        %vm297 = vcmp.lt.s32.totalorder %v273, 16
        %vm298 = vcmp.lt.s32.totalorder %v274, 16
        %vm299 = vmand %vm275, %vm287
        %vm300 = vmand %vm276, %vm288
        %vm301 = vmand %vm277, %vm289
        %vm302 = vmand %vm278, %vm290
        %vm303 = vmand %vm279, %vm291
        %vm304 = vmand %vm280, %vm292
        %vm305 = vmand %vm281, %vm293
        %vm306 = vmand %vm282, %vm294
        %vm307 = vmand %vm283, %vm295
        %vm308 = vmand %vm284, %vm296
        %vm309 = vmand %vm285, %vm297
        %vm310 = vmand %vm286, %vm298
        %v311 = vsel %vm299, 1, 0
        %v312 = vsel %vm300, 1, 0
        %v313 = vsel %vm301, 1, 0
        %v314 = vsel %vm302, 1, 0
        %v315 = vsel %vm303, 1, 0
        %v316 = vsel %vm304, 1, 0
        %v317 = vsel %vm305, 1, 0
        %v318 = vsel %vm306, 1, 0
        %v319 = vsel %vm307, 1, 0
        %v320 = vsel %vm308, 1, 0
        %v321 = vsel %vm309, 1, 0
        %v322 = vsel %vm310, 1, 0
        %v323 = vcvt.s32.f32 %v311
        %v324 = vcvt.s32.f32 %v312
        %v325 = vcvt.s32.f32 %v313
        %v326 = vcvt.s32.f32 %v314
        %v327 = vcvt.s32.f32 %v315
        %v328 = vcvt.s32.f32 %v316
        %v329 = vcvt.s32.f32 %v317
        %v330 = vcvt.s32.f32 %v318
        %v331 = vcvt.s32.f32 %v319
        %v332 = vcvt.s32.f32 %v320
        %v333 = vcvt.s32.f32 %v321
        %v334 = vcvt.s32.f32 %v322
        %v335 = vld [vmem:[%s250] sm:$0xf]
        %v336 = vld [vmem:[%s250 + $0x4] sm:$0xf]
        %v337 = vld [vmem:[%s250 + $0x8] sm:$0xf]
        %v338 = vld [vmem:[%s250 + $0xc] sm:$0xf]
        %v339 = vld [vmem:[%s250 + $0x10] sm:$0xf]
        %v340 = vld [vmem:[%s250 + $0x14] sm:$0xf]
        %v341 = vld [vmem:[%s250 + $0x18] sm:$0xf]
        %v342 = vld [vmem:[%s250 + $0x1c] sm:$0xf]
        %v343 = vld [vmem:[%s250 + $0x20] sm:$0xf]
        %v344 = vld [vmem:[%s250 + $0x24] sm:$0xf]
        %v345 = vld [vmem:[%s250 + $0x28] sm:$0xf]
        %v346 = vld [vmem:[%s250 + $0x2c] sm:$0xf]
        %v347 = vld [vmem:[%s250 + $0x30] sm:$0xf]
        %v348 = vld [vmem:[%s250 + $0x34] sm:$0xf]
        %v349 = vld [vmem:[%s250 + $0x38] sm:$0xf]
        %v350 = vld [vmem:[%s250 + $0x3c] sm:$0xf]
        %v351 = vld [vmem:[%s250 + $0x40] sm:$0xf]
        %v352 = vld [vmem:[%s250 + $0x44] sm:$0xf]
        %v353 = vld [vmem:[%s250 + $0x48] sm:$0xf]
        %v354 = vld [vmem:[%s250 + $0x4c] sm:$0xf]
        %v355 = vld [vmem:[%s250 + $0x50] sm:$0xf]
        %v356 = vld [vmem:[%s250 + $0x54] sm:$0xf]
        %v357 = vld [vmem:[%s250 + $0x58] sm:$0xf]
        %v358 = vld [vmem:[%s250 + $0x5c] sm:$0xf]
        %v359 = vunpack.c.l.bf16 %v335
        %v360 = vunpack.c.l.bf16 %v336
        %v361 = vunpack.c.l.bf16 %v337
        %v362 = vunpack.c.l.bf16 %v338
        %v363 = vunpack.c.l.bf16 %v339
        %v364 = vunpack.c.l.bf16 %v340
        %v365 = vunpack.c.l.bf16 %v341
        %v366 = vunpack.c.l.bf16 %v342
        %v367 = vunpack.c.l.bf16 %v343
        %v368 = vunpack.c.l.bf16 %v344
        %v369 = vunpack.c.l.bf16 %v345
        %v370 = vunpack.c.l.bf16 %v346
        %v371 = vunpack.c.l.bf16 %v347
        %v372 = vunpack.c.l.bf16 %v348
        %v373 = vunpack.c.l.bf16 %v349
        %v374 = vunpack.c.l.bf16 %v350
        %v375 = vunpack.c.l.bf16 %v351
        %v376 = vunpack.c.l.bf16 %v352
        %v377 = vunpack.c.l.bf16 %v353
        %v378 = vunpack.c.l.bf16 %v354
        %v379 = vunpack.c.l.bf16 %v355
        %v380 = vunpack.c.l.bf16 %v356
        %v381 = vunpack.c.l.bf16 %v357
        %v382 = vunpack.c.l.bf16 %v358
        %v383 = vld [vmem:[%s1] sm:$0x1]
        %v384 = vld [vmem:[%s2] sm:$0x1]
        %v385 = vlaneseq
        %v386 = vshrl.u32 %v385, 7
        %v387 = vsub.s32 0, %v386
        %v388 = vrot.slane %v383, %v387
        %v389 = vmul.f32 %v359, %v388
        %v390 = vmul.f32 %v360, %v388
        %v391 = vmul.f32 %v361, %v388
        %v392 = vmul.f32 %v362, %v388
        %v393 = vmul.f32 %v363, %v388
        %v394 = vmul.f32 %v364, %v388
        %v395 = vmul.f32 %v365, %v388
        %v396 = vmul.f32 %v366, %v388
        %v397 = vmul.f32 %v367, %v388
        %v398 = vmul.f32 %v368, %v388
        %v399 = vmul.f32 %v369, %v388
        %v400 = vmul.f32 %v370, %v388
        %v401 = vmul.f32 %v371, %v388
        %v402 = vmul.f32 %v372, %v388
        %v403 = vmul.f32 %v373, %v388
        %v404 = vmul.f32 %v374, %v388
        %v405 = vmul.f32 %v375, %v388
        %v406 = vmul.f32 %v376, %v388
        %v407 = vmul.f32 %v377, %v388
        %v408 = vmul.f32 %v378, %v388
        %v409 = vmul.f32 %v379, %v388
        %v410 = vmul.f32 %v380, %v388
        %v411 = vmul.f32 %v381, %v388
        %v412 = vmul.f32 %v382, %v388
        %v413 = vlaneseq
        %v414 = vshrl.u32 %v413, 7
        %v415 = vsub.s32 0, %v414
        %v416 = vrot.slane %v384, %v415
        %v417 = vadd.f32 %v389, %v416
        %v418 = vadd.f32 %v390, %v416
        %v419 = vadd.f32 %v391, %v416
        %v420 = vadd.f32 %v392, %v416
        %v421 = vadd.f32 %v393, %v416
        %v422 = vadd.f32 %v394, %v416
        %v423 = vadd.f32 %v395, %v416
        %v424 = vadd.f32 %v396, %v416
        %v425 = vadd.f32 %v397, %v416
        %v426 = vadd.f32 %v398, %v416
        %v427 = vadd.f32 %v399, %v416
        %v428 = vadd.f32 %v400, %v416
        %v429 = vadd.f32 %v401, %v416
        %v430 = vadd.f32 %v402, %v416
        %v431 = vadd.f32 %v403, %v416
        %v432 = vadd.f32 %v404, %v416
        %v433 = vadd.f32 %v405, %v416
        %v434 = vadd.f32 %v406, %v416
        %v435 = vadd.f32 %v407, %v416
        %v436 = vadd.f32 %v408, %v416
        %v437 = vadd.f32 %v409, %v416
        %v438 = vadd.f32 %v410, %v416
        %v439 = vadd.f32 %v411, %v416
        %v440 = vadd.f32 %v412, %v416
        %v441 = vmax.f32 %v417, 0.0
        %v442 = vmax.f32 %v418, 0.0
        %v443 = vmax.f32 %v419, 0.0
        %v444 = vmax.f32 %v420, 0.0
        %v445 = vmax.f32 %v421, 0.0
        %v446 = vmax.f32 %v422, 0.0
        %v447 = vmax.f32 %v423, 0.0
        %v448 = vmax.f32 %v424, 0.0
        %v449 = vmax.f32 %v425, 0.0
        %v450 = vmax.f32 %v426, 0.0
        %v451 = vmax.f32 %v427, 0.0
        %v452 = vmax.f32 %v428, 0.0
        %v453 = vmax.f32 %v429, 0.0
        %v454 = vmax.f32 %v430, 0.0
        %v455 = vmax.f32 %v431, 0.0
        %v456 = vmax.f32 %v432, 0.0
        %v457 = vmax.f32 %v433, 0.0
        %v458 = vmax.f32 %v434, 0.0
        %v459 = vmax.f32 %v435, 0.0
        %v460 = vmax.f32 %v436, 0.0
        %v461 = vmax.f32 %v437, 0.0
        %v462 = vmax.f32 %v438, 0.0
        %v463 = vmax.f32 %v439, 0.0
        %v464 = vmax.f32 %v440, 0.0
        %v465 = vmul.f32 %v441, %v323
        %v466 = vmul.f32 %v442, %v323
        %v467 = vmul.f32 %v443, %v324
        %v468 = vmul.f32 %v444, %v324
        %v469 = vmul.f32 %v445, %v325
        %v470 = vmul.f32 %v446, %v325
        %v471 = vmul.f32 %v447, %v326
        %v472 = vmul.f32 %v448, %v326
        %v473 = vmul.f32 %v449, %v327
        %v474 = vmul.f32 %v450, %v327
        %v475 = vmul.f32 %v451, %v328
        %v476 = vmul.f32 %v452, %v328
        %v477 = vmul.f32 %v453, %v329
        %v478 = vmul.f32 %v454, %v329
        %v479 = vmul.f32 %v455, %v330
        %v480 = vmul.f32 %v456, %v330
        %v481 = vmul.f32 %v457, %v331
        %v482 = vmul.f32 %v458, %v331
        %v483 = vmul.f32 %v459, %v332
        %v484 = vmul.f32 %v460, %v332
        %v485 = vmul.f32 %v461, %v333
        %v486 = vmul.f32 %v462, %v333
        %v487 = vmul.f32 %v463, %v334
        %v488 = vmul.f32 %v464, %v334
        %v489 = vpack.c.bf16 %v466, %v465
        %v490 = vpack.c.bf16 %v468, %v467
        %v491 = vpack.c.bf16 %v470, %v469
        %v492 = vpack.c.bf16 %v472, %v471
        %v493 = vpack.c.bf16 %v474, %v473
        %v494 = vpack.c.bf16 %v476, %v475
        %v495 = vpack.c.bf16 %v478, %v477
        %v496 = vpack.c.bf16 %v480, %v479
        %v497 = vpack.c.bf16 %v482, %v481
        %v498 = vpack.c.bf16 %v484, %v483
        %v499 = vpack.c.bf16 %v486, %v485
        %v500 = vpack.c.bf16 %v488, %v487
        %v502 = vshrl.u32 0, 16
        %v504 = vrot.slane %v502, 7
        %v505 = vshll.u32 0, 16
        %v507 = vor.u32 %v504, %v505
        %v509 = vshrl.u32 %v489, 16
        %v511 = vrot.slane %v509, 7
        %v512 = vshll.u32 %v489, 16
        %v514 = vor.u32 %v511, %v512
        %v516 = vshrl.u32 %v490, 16
        %v518 = vrot.slane %v516, 7
        %v519 = vshll.u32 %v490, 16
        %v521 = vor.u32 %v518, %v519
        %v523 = vshrl.u32 %v491, 16
        %v525 = vrot.slane %v523, 7
        %v526 = vshll.u32 %v491, 16
        %v528 = vor.u32 %v525, %v526
        %v530 = vshrl.u32 %v492, 16
        %v532 = vrot.slane %v530, 7
        %v533 = vshll.u32 %v492, 16
        %v535 = vor.u32 %v532, %v533
        %v537 = vshrl.u32 %v493, 16
        %v539 = vrot.slane %v537, 7
        %v540 = vshll.u32 %v493, 16
        %v542 = vor.u32 %v539, %v540
        %v544 = vshrl.u32 %v494, 16
        %v546 = vrot.slane %v544, 7
        %v547 = vshll.u32 %v494, 16
        %v549 = vor.u32 %v546, %v547
        %v551 = vshrl.u32 %v495, 16
        %v553 = vrot.slane %v551, 7
        %v554 = vshll.u32 %v495, 16
        %v556 = vor.u32 %v553, %v554
        %v558 = vshrl.u32 %v496, 16
        %v560 = vrot.slane %v558, 7
        %v561 = vshll.u32 %v496, 16
        %v563 = vor.u32 %v560, %v561
        %v565 = vshrl.u32 %v497, 16
        %v567 = vrot.slane %v565, 7
        %v568 = vshll.u32 %v497, 16
        %v570 = vor.u32 %v567, %v568
        %v572 = vshrl.u32 %v498, 16
        %v574 = vrot.slane %v572, 7
        %v575 = vshll.u32 %v498, 16
        %v577 = vor.u32 %v574, %v575
        %v579 = vshrl.u32 %v499, 16
        %v581 = vrot.slane %v579, 7
        %v582 = vshll.u32 %v499, 16
        %v584 = vor.u32 %v581, %v582
        %vm597 = vcmask 1040384
        %vm598 = vsmask.f32 256
        %vm599 = vmand %vm597, %vm598
        %v600 = vsel %vm599, 0, %v507
        %v601 = vsel %vm599, 0, %v514
        %v602 = vsel %vm599, 0, %v521
        %v603 = vsel %vm599, 0, %v528
        %v604 = vsel %vm599, 0, %v535
        %v605 = vsel %vm599, 0, %v542
        %v606 = vsel %vm599, 0, %v549
        %v607 = vsel %vm599, 0, %v556
        %v608 = vsel %vm599, 0, %v563
        %v609 = vsel %vm599, 0, %v570
        %v610 = vsel %vm599, 0, %v577
        %v611 = vsel %vm599, 0, %v584
        %v612 = vrot.slane %v505, 1
        %v613 = vor.u32 %v502, %v612
        %v614 = vrot.slane %v512, 1
        %v615 = vor.u32 %v509, %v614
        %v616 = vrot.slane %v519, 1
        %v617 = vor.u32 %v516, %v616
        %v618 = vrot.slane %v526, 1
        %v619 = vor.u32 %v523, %v618
        %v620 = vrot.slane %v533, 1
        %v621 = vor.u32 %v530, %v620
        %v622 = vrot.slane %v540, 1
        %v623 = vor.u32 %v537, %v622
        %v624 = vrot.slane %v547, 1
        %v625 = vor.u32 %v544, %v624
        %v626 = vrot.slane %v554, 1
        %v627 = vor.u32 %v551, %v626
        %v628 = vrot.slane %v561, 1
        %v629 = vor.u32 %v558, %v628
        %v630 = vrot.slane %v568, 1
        %v631 = vor.u32 %v565, %v630
        %v632 = vrot.slane %v575, 1
        %v633 = vor.u32 %v572, %v632
        %v634 = vrot.slane %v582, 1
        %v635 = vor.u32 %v579, %v634
        %vm648 = vcmask 1047552
        %vm649 = vsmask.f32 7424
        %vm650 = vmand %vm648, %vm649
        %v651 = vsel %vm650, %v613, 0
        %v652 = vsel %vm650, %v615, 0
        %v653 = vsel %vm650, %v617, 0
        %v654 = vsel %vm650, %v619, 0
        %v655 = vsel %vm650, %v621, 0
        %v656 = vsel %vm650, %v623, 0
        %v657 = vsel %vm650, %v625, 0
        %v658 = vsel %vm650, %v627, 0
        %v659 = vsel %vm650, %v629, 0
        %v660 = vsel %vm650, %v631, 0
        %v661 = vsel %vm650, %v633, 0
        %v662 = vsel %vm650, %v635, 0
        %675 = vrot.lane.b32.xlu0 0, 8
        %v676 = vpop.permute.xlu0 %675
        %677 = vrot.lane.b32.xlu0 %v489, 8
        %v678 = vpop.permute.xlu0 %677
        %679 = vrot.lane.b32.xlu0 %v490, 8
        %v680 = vpop.permute.xlu0 %679
        %681 = vrot.lane.b32.xlu0 %v491, 8
        %v682 = vpop.permute.xlu0 %681
        %683 = vrot.lane.b32.xlu0 %v492, 8
        %v684 = vpop.permute.xlu0 %683
        %685 = vrot.lane.b32.xlu0 %v493, 8
        %v686 = vpop.permute.xlu0 %685
        %687 = vrot.lane.b32.xlu0 %v494, 8
        %v688 = vpop.permute.xlu0 %687
        %689 = vrot.lane.b32.xlu0 %v495, 8
        %v690 = vpop.permute.xlu0 %689
        %691 = vrot.lane.b32.xlu0 %v496, 8
        %v692 = vpop.permute.xlu0 %691
        %693 = vrot.lane.b32.xlu0 %v497, 8
        %v694 = vpop.permute.xlu0 %693
        %695 = vrot.lane.b32.xlu0 %v498, 8
        %v696 = vpop.permute.xlu0 %695
        %697 = vrot.lane.b32.xlu0 %v499, 8
        %v698 = vpop.permute.xlu0 %697
        %711 = vrot.lane.b32.xlu0 %v651, 16
        %v712 = vpop.permute.xlu0 %711
        %713 = vrot.lane.b32.xlu0 %v652, 16
        %v714 = vpop.permute.xlu0 %713
        %715 = vrot.lane.b32.xlu0 %v653, 16
        %v716 = vpop.permute.xlu0 %715
        %717 = vrot.lane.b32.xlu0 %v654, 16
        %v718 = vpop.permute.xlu0 %717
        %719 = vrot.lane.b32.xlu0 %v655, 16
        %v720 = vpop.permute.xlu0 %719
        %721 = vrot.lane.b32.xlu0 %v656, 16
        %v722 = vpop.permute.xlu0 %721
        %723 = vrot.lane.b32.xlu0 %v657, 16
        %v724 = vpop.permute.xlu0 %723
        %725 = vrot.lane.b32.xlu0 %v658, 16
        %v726 = vpop.permute.xlu0 %725
        %727 = vrot.lane.b32.xlu0 %v659, 16
        %v728 = vpop.permute.xlu0 %727
        %729 = vrot.lane.b32.xlu0 %v660, 16
        %v730 = vpop.permute.xlu0 %729
        %731 = vrot.lane.b32.xlu0 %v661, 16
        %v732 = vpop.permute.xlu0 %731
        %733 = vrot.lane.b32.xlu0 %v662, 16
        %v734 = vpop.permute.xlu0 %733
        %vm735 = vcmask 64512
        %v738 = vsel %vm735, %v600, %v676
        %v741 = vsel %vm735, %v601, %v678
        %v744 = vsel %vm735, %v602, %v680
        %v747 = vsel %vm735, %v603, %v682
        %v750 = vsel %vm735, %v604, %v684
        %v753 = vsel %vm735, %v605, %v686
        %v756 = vsel %vm735, %v606, %v688
        %v759 = vsel %vm735, %v607, %v690
        %v762 = vsel %vm735, %v608, %v692
        %v765 = vsel %vm735, %v609, %v694
        %v768 = vsel %vm735, %v610, %v696
        %v771 = vsel %vm735, %v611, %v698
        %vm772 = vcmask 130048
        %v774 = vsel %vm772, %v738, %v712
        %v776 = vsel %vm772, %v741, %v714
        %v778 = vsel %vm772, %v744, %v716
        %v780 = vsel %vm772, %v747, %v718
        %v782 = vsel %vm772, %v750, %v720
        %v784 = vsel %vm772, %v753, %v722
        %v786 = vsel %vm772, %v756, %v724
        %v788 = vsel %vm772, %v759, %v726
        %v790 = vsel %vm772, %v762, %v728
        %v792 = vsel %vm772, %v765, %v730
        %v794 = vsel %vm772, %v768, %v732
        %v796 = vsel %vm772, %v771, %v734
        %v797 = vld [vmem:[%s3] sm:$0xf]
        %v798 = vld [vmem:[%s3 + $0x4] sm:$0xf]
        %v799 = vld [vmem:[%s3 + $0x8] sm:$0xf]
        %v801 = vshrl.u32 %v500, 16
        %v803 = vrot.slane %v801, 7
        %v804 = vshll.u32 %v500, 16
        %v806 = vor.u32 %v803, %v804
        %v808 = vsel %vm599, 0, %v806
        %v809 = vrot.slane %v804, 1
        %v810 = vor.u32 %v801, %v809
        %v812 = vsel %vm650, %v810, 0
        %814 = vrot.lane.b32.xlu0 %v500, 8
        %v815 = vpop.permute.xlu0 %814
        %817 = vrot.lane.b32.xlu0 %v812, 16
        %v818 = vpop.permute.xlu0 %817
        %v821 = vsel %vm735, %v808, %v815
        %v823 = vsel %vm772, %v821, %v818
        %s824 = scalar_lea.vmem %s3, 12
        %v825 = vld [vmem:[%s824] sm:$0xf]
        %v826 = vld [vmem:[%s824 + $0x4] sm:$0xf]
        %v827 = vld [vmem:[%s824 + $0x8] sm:$0xf]
        %v831 = vunpack.c.l.b16 %v825
        %v832 = vunpack.c.l.b16 %v826
        %v833 = vunpack.c.l.b16 %v827
        %v834 = vpack.c.b16 %v832, %v831
        %v835 = vpack.c.b16 %v833, %v833
        %vm837 = vcmask 195584
        %v838 = vsel %vm837, %v776, 0
        %v840 = vsel %vm837, %v778, 0
        %v842 = vsel %vm837, %v780, 0
        %v844 = vsel %vm837, %v782, 0
        %v846 = vsel %vm837, %v784, 0
        %v848 = vsel %vm837, %v786, 0
        %v850 = vsel %vm837, %v788, 0
        %v852 = vsel %vm837, %v790, 0
        %v854 = vsel %vm837, %v792, 0
        %v856 = vsel %vm837, %v794, 0
        %v858 = vsel %vm837, %v796, 0
        %v860 = vsel %vm837, %v823, 0
        %vm862 = vcmask 1043456
        %v864 = vsel %vm862, %v835, 0
        %866 = vmatprep.subr.bf16.mxu0 0
        %867 = vmatpush1.bf16.msra.mxu0 0
        %868 = vmatprep.subr.bf16.mxu0 0
        %869 = vmatpush1.bf16.msra.mxu0 0
        %870 = vmatprep.subr.bf16.mxu0 0
        %871 = vmatpush1.bf16.msra.mxu0 0
        %872 = vmatprep.subr.bf16.mxu0 0
        %873 = vmatpush1.bf16.msra.mxu0 0
        %874 = vmatprep.subr.bf16.mxu0 0
        %875 = vmatpush1.bf16.msra.mxu0 0
        %876 = vmatprep.subr.bf16.mxu0 0
        %877 = vmatpush1.bf16.msra.mxu0 0
        %878 = vmatprep.subr.bf16.mxu0 0
        %879 = vmatpush1.bf16.msra.mxu0 %v864
        %880 = vmatprep.subr.bf16.mxu0 0
        %881 = vmatpush1.bf16.msra.mxu0 %v834
        %882 = vmatprep.subr.bf16.mxu0 0
        %883 = vmatpush2.bf16.msra.mxu0 0
        %884 = vmatprep.subr.bf16.mxu0 0
        %885 = vmatpush2.bf16.msra.mxu0 0
        %886 = vmatprep.subr.bf16.mxu0 0
        %887 = vmatpush2.bf16.msra.mxu0 0
        %888 = vmatprep.subr.bf16.mxu0 0
        %889 = vmatpush2.bf16.msra.mxu0 0
        %890 = vmatprep.subr.bf16.mxu0 0
        %891 = vmatpush2.bf16.msra.mxu0 0
        %892 = vmatprep.subr.bf16.mxu0 0
        %893 = vmatpush2.bf16.msra.mxu0 0
        %894 = vmatprep.subr.bf16.mxu0 0
        %895 = vmatpush2.bf16.msra.mxu0 0
        %896 = vmatprep.subr.bf16.mxu0 0
        %897 = vmatpush2.bf16.msra.mxu0 0
        %898 = vmatprep.mubr.bf16.mxu0 0
        %899 = vmatmul.mubr.bf16.gmra.mxu0 %v838
        %v900 = vpop.f32.mrf.mxu0
        %v901 = vadd.f32 0.0, %v900
        %v902 = vpop.f32.mrf.mxu0
        %v903 = vpop.f32.mrf.mxu0
        %v904 = vadd.f32 0.0, %v903
        %v905 = vpop.f32.mrf.mxu0
        %906 = vmatprep.mubr.bf16.mxu0 0
        %907 = vmatmul.mubr.bf16.gmra.mxu0 %v840
        %v908 = vpop.f32.mrf.mxu0
        %v909 = vadd.f32 0.0, %v908
        %v910 = vpop.f32.mrf.mxu0
        %v911 = vpop.f32.mrf.mxu0
        %v912 = vadd.f32 0.0, %v911
        %v913 = vpop.f32.mrf.mxu0
        %914 = vmatprep.mubr.bf16.mxu0 0
        %915 = vmatmul.mubr.bf16.gmra.mxu0 %v842
        %v916 = vpop.f32.mrf.mxu0
        %v917 = vadd.f32 0.0, %v916
        %v918 = vpop.f32.mrf.mxu0
        %v919 = vpop.f32.mrf.mxu0
        %v920 = vadd.f32 0.0, %v919
        %v921 = vpop.f32.mrf.mxu0
        %922 = vmatprep.mubr.bf16.mxu0 0
        %923 = vmatmul.mubr.bf16.gmra.mxu0 %v844
        %v924 = vpop.f32.mrf.mxu0
        %v925 = vadd.f32 0.0, %v924
        %v926 = vpop.f32.mrf.mxu0
        %v927 = vpop.f32.mrf.mxu0
        %v928 = vadd.f32 0.0, %v927
        %v929 = vpop.f32.mrf.mxu0
        %930 = vmatprep.mubr.bf16.mxu0 0
        %931 = vmatmul.mubr.bf16.gmra.mxu0 %v846
        %v932 = vpop.f32.mrf.mxu0
        %v933 = vadd.f32 0.0, %v932
        %v934 = vpop.f32.mrf.mxu0
        %v935 = vpop.f32.mrf.mxu0
        %v936 = vadd.f32 0.0, %v935
        %v937 = vpop.f32.mrf.mxu0
        %938 = vmatprep.mubr.bf16.mxu0 0
        %939 = vmatmul.mubr.bf16.gmra.mxu0 %v848
        %v940 = vpop.f32.mrf.mxu0
        %v941 = vadd.f32 0.0, %v940
        %v942 = vpop.f32.mrf.mxu0
        %v943 = vpop.f32.mrf.mxu0
        %v944 = vadd.f32 0.0, %v943
        %v945 = vpop.f32.mrf.mxu0
        %946 = vmatprep.mubr.bf16.mxu0 0
        %947 = vmatmul.mubr.bf16.gmra.mxu0 %v850
        %v948 = vpop.f32.mrf.mxu0
        %v949 = vadd.f32 0.0, %v948
        %v950 = vpop.f32.mrf.mxu0
        %v951 = vpop.f32.mrf.mxu0
        %v952 = vadd.f32 0.0, %v951
        %v953 = vpop.f32.mrf.mxu0
        %954 = vmatprep.mubr.bf16.mxu0 0
        %955 = vmatmul.mubr.bf16.gmra.mxu0 %v852
        %v956 = vpop.f32.mrf.mxu0
        %v957 = vadd.f32 0.0, %v956
        %v958 = vpop.f32.mrf.mxu0
        %v959 = vpop.f32.mrf.mxu0
        %v960 = vadd.f32 0.0, %v959
        %v961 = vpop.f32.mrf.mxu0
        %962 = vmatprep.mubr.bf16.mxu0 0
        %963 = vmatmul.mubr.bf16.gmra.mxu0 %v854
        %v964 = vpop.f32.mrf.mxu0
        %v965 = vadd.f32 0.0, %v964
        %v966 = vpop.f32.mrf.mxu0
        %v967 = vpop.f32.mrf.mxu0
        %v968 = vadd.f32 0.0, %v967
        %v969 = vpop.f32.mrf.mxu0
        %970 = vmatprep.mubr.bf16.mxu0 0
        %971 = vmatmul.mubr.bf16.gmra.mxu0 %v856
        %v972 = vpop.f32.mrf.mxu0
        %v973 = vadd.f32 0.0, %v972
        %v974 = vpop.f32.mrf.mxu0
        %v975 = vpop.f32.mrf.mxu0
        %v976 = vadd.f32 0.0, %v975
        %v977 = vpop.f32.mrf.mxu0
        %978 = vmatprep.mubr.bf16.mxu0 0
        %979 = vmatmul.mubr.bf16.gmra.mxu0 %v858
        %v980 = vpop.f32.mrf.mxu0
        %v981 = vadd.f32 0.0, %v980
        %v982 = vpop.f32.mrf.mxu0
        %v983 = vpop.f32.mrf.mxu0
        %v984 = vadd.f32 0.0, %v983
        %v985 = vpop.f32.mrf.mxu0
        %986 = vmatprep.mubr.bf16.mxu0 0
        %987 = vmatmul.mubr.bf16.gmra.mxu0 %v860
        %v988 = vpop.f32.mrf.mxu0
        %v989 = vadd.f32 0.0, %v988
        %v990 = vpop.f32.mrf.mxu0
        %v991 = vpop.f32.mrf.mxu0
        %v992 = vadd.f32 0.0, %v991
        %v993 = vpop.f32.mrf.mxu0
        %994 = vdwg.mxu0
        %v998 = vunpack.c.l.b16 %v797
        %v999 = vunpack.c.l.b16 %v798
        %v1000 = vunpack.c.l.b16 %v799
        %v1001 = vpack.c.b16 %v999, %v998
        %v1002 = vpack.c.b16 %v1000, %v1000
        %v1004 = vsel %vm837, %v774, 0
        %v1007 = vsel %vm862, %v1002, 0
        %1009 = vmatprep.subr.bf16.mxu0 0
        %1010 = vmatpush1.bf16.msra.mxu0 0
        %1011 = vmatprep.subr.bf16.mxu0 0
        %1012 = vmatpush1.bf16.msra.mxu0 0
        %1013 = vmatprep.subr.bf16.mxu0 0
        %1014 = vmatpush1.bf16.msra.mxu0 0
        %1015 = vmatprep.subr.bf16.mxu0 0
        %1016 = vmatpush1.bf16.msra.mxu0 0
        %1017 = vmatprep.subr.bf16.mxu0 0
        %1018 = vmatpush1.bf16.msra.mxu0 0
        %1019 = vmatprep.subr.bf16.mxu0 0
        %1020 = vmatpush1.bf16.msra.mxu0 0
        %1021 = vmatprep.subr.bf16.mxu0 0
        %1022 = vmatpush1.bf16.msra.mxu0 %v1007
        %1023 = vmatprep.subr.bf16.mxu0 0
        %1024 = vmatpush1.bf16.msra.mxu0 %v1001
        %1025 = vmatprep.subr.bf16.mxu0 0
        %1026 = vmatpush2.bf16.msra.mxu0 0
        %1027 = vmatprep.subr.bf16.mxu0 0
        %1028 = vmatpush2.bf16.msra.mxu0 0
        %1029 = vmatprep.subr.bf16.mxu0 0
        %1030 = vmatpush2.bf16.msra.mxu0 0
        %1031 = vmatprep.subr.bf16.mxu0 0
        %1032 = vmatpush2.bf16.msra.mxu0 0
        %1033 = vmatprep.subr.bf16.mxu0 0
        %1034 = vmatpush2.bf16.msra.mxu0 0
        %1035 = vmatprep.subr.bf16.mxu0 0
        %1036 = vmatpush2.bf16.msra.mxu0 0
        %1037 = vmatprep.subr.bf16.mxu0 0
        %1038 = vmatpush2.bf16.msra.mxu0 0
        %1039 = vmatprep.subr.bf16.mxu0 0
        %1040 = vmatpush2.bf16.msra.mxu0 0
        %1041 = vmatprep.mubr.bf16.mxu0 0
        %1042 = vmatmul.mubr.bf16.gmra.mxu0 %v1004
        %v1043 = vpop.f32.mrf.mxu0
        %v1044 = vadd.f32 %v901, %v1043
        %v1045 = vpop.f32.mrf.mxu0
        %v1046 = vpop.f32.mrf.mxu0
        %v1047 = vadd.f32 %v904, %v1046
        %v1048 = vpop.f32.mrf.mxu0
        %1049 = vmatprep.mubr.bf16.mxu0 0
        %1050 = vmatmul.mubr.bf16.gmra.mxu0 %v838
        %v1051 = vpop.f32.mrf.mxu0
        %v1052 = vadd.f32 %v909, %v1051
        %v1053 = vpop.f32.mrf.mxu0
        %v1054 = vpop.f32.mrf.mxu0
        %v1055 = vadd.f32 %v912, %v1054
        %v1056 = vpop.f32.mrf.mxu0
        %1057 = vmatprep.mubr.bf16.mxu0 0
        %1058 = vmatmul.mubr.bf16.gmra.mxu0 %v840
        %v1059 = vpop.f32.mrf.mxu0
        %v1060 = vadd.f32 %v917, %v1059
        %v1061 = vpop.f32.mrf.mxu0
        %v1062 = vpop.f32.mrf.mxu0
        %v1063 = vadd.f32 %v920, %v1062
        %v1064 = vpop.f32.mrf.mxu0
        %1065 = vmatprep.mubr.bf16.mxu0 0
        %1066 = vmatmul.mubr.bf16.gmra.mxu0 %v842
        %v1067 = vpop.f32.mrf.mxu0
        %v1068 = vadd.f32 %v925, %v1067
        %v1069 = vpop.f32.mrf.mxu0
        %v1070 = vpop.f32.mrf.mxu0
        %v1071 = vadd.f32 %v928, %v1070
        %v1072 = vpop.f32.mrf.mxu0
        %1073 = vmatprep.mubr.bf16.mxu0 0
        %1074 = vmatmul.mubr.bf16.gmra.mxu0 %v844
        %v1075 = vpop.f32.mrf.mxu0
        %v1076 = vadd.f32 %v933, %v1075
        %v1077 = vpop.f32.mrf.mxu0
        %v1078 = vpop.f32.mrf.mxu0
        %v1079 = vadd.f32 %v936, %v1078
        %v1080 = vpop.f32.mrf.mxu0
        %1081 = vmatprep.mubr.bf16.mxu0 0
        %1082 = vmatmul.mubr.bf16.gmra.mxu0 %v846
        %v1083 = vpop.f32.mrf.mxu0
        %v1084 = vadd.f32 %v941, %v1083
        %v1085 = vpop.f32.mrf.mxu0
        %v1086 = vpop.f32.mrf.mxu0
        %v1087 = vadd.f32 %v944, %v1086
        %v1088 = vpop.f32.mrf.mxu0
        %1089 = vmatprep.mubr.bf16.mxu0 0
        %1090 = vmatmul.mubr.bf16.gmra.mxu0 %v848
        %v1091 = vpop.f32.mrf.mxu0
        %v1092 = vadd.f32 %v949, %v1091
        %v1093 = vpop.f32.mrf.mxu0
        %v1094 = vpop.f32.mrf.mxu0
        %v1095 = vadd.f32 %v952, %v1094
        %v1096 = vpop.f32.mrf.mxu0
        %1097 = vmatprep.mubr.bf16.mxu0 0
        %1098 = vmatmul.mubr.bf16.gmra.mxu0 %v850
        %v1099 = vpop.f32.mrf.mxu0
        %v1100 = vadd.f32 %v957, %v1099
        %v1101 = vpop.f32.mrf.mxu0
        %v1102 = vpop.f32.mrf.mxu0
        %v1103 = vadd.f32 %v960, %v1102
        %v1104 = vpop.f32.mrf.mxu0
        %1105 = vmatprep.mubr.bf16.mxu0 0
        %1106 = vmatmul.mubr.bf16.gmra.mxu0 %v852
        %v1107 = vpop.f32.mrf.mxu0
        %v1108 = vadd.f32 %v965, %v1107
        %v1109 = vpop.f32.mrf.mxu0
        %v1110 = vpop.f32.mrf.mxu0
        %v1111 = vadd.f32 %v968, %v1110
        %v1112 = vpop.f32.mrf.mxu0
        %1113 = vmatprep.mubr.bf16.mxu0 0
        %1114 = vmatmul.mubr.bf16.gmra.mxu0 %v854
        %v1115 = vpop.f32.mrf.mxu0
        %v1116 = vadd.f32 %v973, %v1115
        %v1117 = vpop.f32.mrf.mxu0
        %v1118 = vpop.f32.mrf.mxu0
        %v1119 = vadd.f32 %v976, %v1118
        %v1120 = vpop.f32.mrf.mxu0
        %1121 = vmatprep.mubr.bf16.mxu0 0
        %1122 = vmatmul.mubr.bf16.gmra.mxu0 %v856
        %v1123 = vpop.f32.mrf.mxu0
        %v1124 = vadd.f32 %v981, %v1123
        %v1125 = vpop.f32.mrf.mxu0
        %v1126 = vpop.f32.mrf.mxu0
        %v1127 = vadd.f32 %v984, %v1126
        %v1128 = vpop.f32.mrf.mxu0
        %1129 = vmatprep.mubr.bf16.mxu0 0
        %1130 = vmatmul.mubr.bf16.gmra.mxu0 %v858
        %v1131 = vpop.f32.mrf.mxu0
        %v1132 = vadd.f32 %v989, %v1131
        %v1133 = vpop.f32.mrf.mxu0
        %v1134 = vpop.f32.mrf.mxu0
        %v1135 = vadd.f32 %v992, %v1134
        %v1136 = vpop.f32.mrf.mxu0
        %1137 = vdwg.mxu0
        %s1138 = scalar_lea.vmem %s3, 24
        %v1139 = vld [vmem:[%s1138] sm:$0xf]
        %v1140 = vld [vmem:[%s1138 + $0x4] sm:$0xf]
        %v1141 = vld [vmem:[%s1138 + $0x8] sm:$0xf]
        %v1145 = vunpack.c.l.b16 %v1139
        %v1146 = vunpack.c.l.b16 %v1140
        %v1147 = vunpack.c.l.b16 %v1141
        %v1148 = vpack.c.b16 %v1146, %v1145
        %v1149 = vpack.c.b16 %v1147, %v1147
        %v1152 = vsel %vm862, %v1149, 0
        %1154 = vmatprep.subr.bf16.mxu0 0
        %1155 = vmatpush1.bf16.msra.mxu0 0
        %1156 = vmatprep.subr.bf16.mxu0 0
        %1157 = vmatpush1.bf16.msra.mxu0 0
        %1158 = vmatprep.subr.bf16.mxu0 0
        %1159 = vmatpush1.bf16.msra.mxu0 0
        %1160 = vmatprep.subr.bf16.mxu0 0
        %1161 = vmatpush1.bf16.msra.mxu0 0
        %1162 = vmatprep.subr.bf16.mxu0 0
        %1163 = vmatpush1.bf16.msra.mxu0 0
        %1164 = vmatprep.subr.bf16.mxu0 0
        %1165 = vmatpush1.bf16.msra.mxu0 0
        %1166 = vmatprep.subr.bf16.mxu0 0
        %1167 = vmatpush1.bf16.msra.mxu0 %v1152
        %1168 = vmatprep.subr.bf16.mxu0 0
        %1169 = vmatpush1.bf16.msra.mxu0 %v1148
        %1170 = vmatprep.subr.bf16.mxu0 0
        %1171 = vmatpush2.bf16.msra.mxu0 0
        %1172 = vmatprep.subr.bf16.mxu0 0
        %1173 = vmatpush2.bf16.msra.mxu0 0
        %1174 = vmatprep.subr.bf16.mxu0 0
        %1175 = vmatpush2.bf16.msra.mxu0 0
        %1176 = vmatprep.subr.bf16.mxu0 0
        %1177 = vmatpush2.bf16.msra.mxu0 0
        %1178 = vmatprep.subr.bf16.mxu0 0
        %1179 = vmatpush2.bf16.msra.mxu0 0
        %1180 = vmatprep.subr.bf16.mxu0 0
        %1181 = vmatpush2.bf16.msra.mxu0 0
        %1182 = vmatprep.subr.bf16.mxu0 0
        %1183 = vmatpush2.bf16.msra.mxu0 0
        %1184 = vmatprep.subr.bf16.mxu0 0
        %1185 = vmatpush2.bf16.msra.mxu0 0
        %1186 = vmatprep.mubr.bf16.mxu0 0
        %1187 = vmatmul.mubr.bf16.gmra.mxu0 %v840
        %v1188 = vpop.f32.mrf.mxu0
        %v1189 = vadd.f32 0.0, %v1188
        %v1190 = vpop.f32.mrf.mxu0
        %v1191 = vpop.f32.mrf.mxu0
        %v1192 = vadd.f32 0.0, %v1191
        %v1193 = vpop.f32.mrf.mxu0
        %1194 = vmatprep.mubr.bf16.mxu0 0
        %1195 = vmatmul.mubr.bf16.gmra.mxu0 %v842
        %v1196 = vpop.f32.mrf.mxu0
        %v1197 = vadd.f32 0.0, %v1196
        %v1198 = vpop.f32.mrf.mxu0
        %v1199 = vpop.f32.mrf.mxu0
        %v1200 = vadd.f32 0.0, %v1199
        %v1201 = vpop.f32.mrf.mxu0
        %1202 = vmatprep.mubr.bf16.mxu0 0
        %1203 = vmatmul.mubr.bf16.gmra.mxu0 %v844
        %v1204 = vpop.f32.mrf.mxu0
        %v1205 = vadd.f32 0.0, %v1204
        %v1206 = vpop.f32.mrf.mxu0
        %v1207 = vpop.f32.mrf.mxu0
        %v1208 = vadd.f32 0.0, %v1207
        %v1209 = vpop.f32.mrf.mxu0
        %1210 = vmatprep.mubr.bf16.mxu0 0
        %1211 = vmatmul.mubr.bf16.gmra.mxu0 %v846
        %v1212 = vpop.f32.mrf.mxu0
        %v1213 = vadd.f32 0.0, %v1212
        %v1214 = vpop.f32.mrf.mxu0
        %v1215 = vpop.f32.mrf.mxu0
        %v1216 = vadd.f32 0.0, %v1215
        %v1217 = vpop.f32.mrf.mxu0
        %1218 = vmatprep.mubr.bf16.mxu0 0
        %1219 = vmatmul.mubr.bf16.gmra.mxu0 %v848
        %v1220 = vpop.f32.mrf.mxu0
        %v1221 = vadd.f32 0.0, %v1220
        %v1222 = vpop.f32.mrf.mxu0
        %v1223 = vpop.f32.mrf.mxu0
        %v1224 = vadd.f32 0.0, %v1223
        %v1225 = vpop.f32.mrf.mxu0
        %1226 = vmatprep.mubr.bf16.mxu0 0
        %1227 = vmatmul.mubr.bf16.gmra.mxu0 %v850
        %v1228 = vpop.f32.mrf.mxu0
        %v1229 = vadd.f32 0.0, %v1228
        %v1230 = vpop.f32.mrf.mxu0
        %v1231 = vpop.f32.mrf.mxu0
        %v1232 = vadd.f32 0.0, %v1231
        %v1233 = vpop.f32.mrf.mxu0
        %1234 = vmatprep.mubr.bf16.mxu0 0
        %1235 = vmatmul.mubr.bf16.gmra.mxu0 %v852
        %v1236 = vpop.f32.mrf.mxu0
        %v1237 = vadd.f32 0.0, %v1236
        %v1238 = vpop.f32.mrf.mxu0
        %v1239 = vpop.f32.mrf.mxu0
        %v1240 = vadd.f32 0.0, %v1239
        %v1241 = vpop.f32.mrf.mxu0
        %1242 = vmatprep.mubr.bf16.mxu0 0
        %1243 = vmatmul.mubr.bf16.gmra.mxu0 %v854
        %v1244 = vpop.f32.mrf.mxu0
        %v1245 = vadd.f32 0.0, %v1244
        %v1246 = vpop.f32.mrf.mxu0
        %v1247 = vpop.f32.mrf.mxu0
        %v1248 = vadd.f32 0.0, %v1247
        %v1249 = vpop.f32.mrf.mxu0
        %1250 = vmatprep.mubr.bf16.mxu0 0
        %1251 = vmatmul.mubr.bf16.gmra.mxu0 %v856
        %v1252 = vpop.f32.mrf.mxu0
        %v1253 = vadd.f32 0.0, %v1252
        %v1254 = vpop.f32.mrf.mxu0
        %v1255 = vpop.f32.mrf.mxu0
        %v1256 = vadd.f32 0.0, %v1255
        %v1257 = vpop.f32.mrf.mxu0
        %1258 = vmatprep.mubr.bf16.mxu0 0
        %1259 = vmatmul.mubr.bf16.gmra.mxu0 %v858
        %v1260 = vpop.f32.mrf.mxu0
        %v1261 = vadd.f32 0.0, %v1260
        %v1262 = vpop.f32.mrf.mxu0
        %v1263 = vpop.f32.mrf.mxu0
        %v1264 = vadd.f32 0.0, %v1263
        %v1265 = vpop.f32.mrf.mxu0
        %1266 = vmatprep.mubr.bf16.mxu0 0
        %1267 = vmatmul.mubr.bf16.gmra.mxu0 %v860
        %v1268 = vpop.f32.mrf.mxu0
        %v1269 = vadd.f32 0.0, %v1268
        %v1270 = vpop.f32.mrf.mxu0
        %v1271 = vpop.f32.mrf.mxu0
        %v1272 = vadd.f32 0.0, %v1271
        %v1273 = vpop.f32.mrf.mxu0
        %1274 = vmatprep.mubr.bf16.mxu0 0
        %1275 = vmatmul.mubr.bf16.gmra.mxu0 %v1004
        %v1276 = vpop.f32.mrf.mxu0
        %v1277 = vadd.f32 0.0, %v1276
        %v1278 = vpop.f32.mrf.mxu0
        %v1279 = vpop.f32.mrf.mxu0
        %v1280 = vadd.f32 0.0, %v1279
        %v1281 = vpop.f32.mrf.mxu0
        %1282 = vdwg.mxu0
        %v1283 = vadd.f32 %v1044, %v1189
        %v1284 = vadd.f32 %v1047, %v1192
        %v1285 = vadd.f32 %v1052, %v1197
        %v1286 = vadd.f32 %v1055, %v1200
        %v1287 = vadd.f32 %v1060, %v1205
        %v1288 = vadd.f32 %v1063, %v1208
        %v1289 = vadd.f32 %v1068, %v1213
        %v1290 = vadd.f32 %v1071, %v1216
        %v1291 = vadd.f32 %v1076, %v1221
        %v1292 = vadd.f32 %v1079, %v1224
        %v1293 = vadd.f32 %v1084, %v1229
        %v1294 = vadd.f32 %v1087, %v1232
        %v1295 = vadd.f32 %v1092, %v1237
        %v1296 = vadd.f32 %v1095, %v1240
        %v1297 = vadd.f32 %v1100, %v1245
        %v1298 = vadd.f32 %v1103, %v1248
        %v1299 = vadd.f32 %v1108, %v1253
        %v1300 = vadd.f32 %v1111, %v1256
        %v1301 = vadd.f32 %v1116, %v1261
        %v1302 = vadd.f32 %v1119, %v1264
        %v1303 = vadd.f32 %v1124, %v1269
        %v1304 = vadd.f32 %v1127, %v1272
        %v1305 = vadd.f32 %v1132, %v1277
        %v1306 = vadd.f32 %v1135, %v1280
        %v1307 = vld [vmem:[%s1 + $0x1] sm:$0x1]
        %v1308 = vld [vmem:[%s2 + $0x1] sm:$0x1]
        %v1309 = vlaneseq
        %v1310 = vshrl.u32 %v1309, 7
        %v1311 = vsub.s32 0, %v1310
        %v1312 = vrot.slane %v1307, %v1311
        %v1313 = vmul.f32 %v1283, %v1312
        %v1314 = vmul.f32 %v1284, %v1312
        %v1315 = vmul.f32 %v1285, %v1312
        %v1316 = vmul.f32 %v1286, %v1312
        %v1317 = vmul.f32 %v1287, %v1312
        %v1318 = vmul.f32 %v1288, %v1312
        %v1319 = vmul.f32 %v1289, %v1312
        %v1320 = vmul.f32 %v1290, %v1312
        %v1321 = vmul.f32 %v1291, %v1312
        %v1322 = vmul.f32 %v1292, %v1312
        %v1323 = vmul.f32 %v1293, %v1312
        %v1324 = vmul.f32 %v1294, %v1312
        %v1325 = vmul.f32 %v1295, %v1312
        %v1326 = vmul.f32 %v1296, %v1312
        %v1327 = vmul.f32 %v1297, %v1312
        %v1328 = vmul.f32 %v1298, %v1312
        %v1329 = vmul.f32 %v1299, %v1312
        %v1330 = vmul.f32 %v1300, %v1312
        %v1331 = vmul.f32 %v1301, %v1312
        %v1332 = vmul.f32 %v1302, %v1312
        %v1333 = vmul.f32 %v1303, %v1312
        %v1334 = vmul.f32 %v1304, %v1312
        %v1335 = vmul.f32 %v1305, %v1312
        %v1336 = vmul.f32 %v1306, %v1312
        %v1337 = vlaneseq
        %v1338 = vshrl.u32 %v1337, 7
        %v1339 = vsub.s32 0, %v1338
        %v1340 = vrot.slane %v1308, %v1339
        %v1341 = vadd.f32 %v1313, %v1340
        %v1342 = vadd.f32 %v1314, %v1340
        %v1343 = vadd.f32 %v1315, %v1340
        %v1344 = vadd.f32 %v1316, %v1340
        %v1345 = vadd.f32 %v1317, %v1340
        %v1346 = vadd.f32 %v1318, %v1340
        %v1347 = vadd.f32 %v1319, %v1340
        %v1348 = vadd.f32 %v1320, %v1340
        %v1349 = vadd.f32 %v1321, %v1340
        %v1350 = vadd.f32 %v1322, %v1340
        %v1351 = vadd.f32 %v1323, %v1340
        %v1352 = vadd.f32 %v1324, %v1340
        %v1353 = vadd.f32 %v1325, %v1340
        %v1354 = vadd.f32 %v1326, %v1340
        %v1355 = vadd.f32 %v1327, %v1340
        %v1356 = vadd.f32 %v1328, %v1340
        %v1357 = vadd.f32 %v1329, %v1340
        %v1358 = vadd.f32 %v1330, %v1340
        %v1359 = vadd.f32 %v1331, %v1340
        %v1360 = vadd.f32 %v1332, %v1340
        %v1361 = vadd.f32 %v1333, %v1340
        %v1362 = vadd.f32 %v1334, %v1340
        %v1363 = vadd.f32 %v1335, %v1340
        %v1364 = vadd.f32 %v1336, %v1340
        %v1365 = vmax.f32 %v1341, 0.0
        %v1366 = vmax.f32 %v1342, 0.0
        %v1367 = vmax.f32 %v1343, 0.0
        %v1368 = vmax.f32 %v1344, 0.0
        %v1369 = vmax.f32 %v1345, 0.0
        %v1370 = vmax.f32 %v1346, 0.0
        %v1371 = vmax.f32 %v1347, 0.0
        %v1372 = vmax.f32 %v1348, 0.0
        %v1373 = vmax.f32 %v1349, 0.0
        %v1374 = vmax.f32 %v1350, 0.0
        %v1375 = vmax.f32 %v1351, 0.0
        %v1376 = vmax.f32 %v1352, 0.0
        %v1377 = vmax.f32 %v1353, 0.0
        %v1378 = vmax.f32 %v1354, 0.0
        %v1379 = vmax.f32 %v1355, 0.0
        %v1380 = vmax.f32 %v1356, 0.0
        %v1381 = vmax.f32 %v1357, 0.0
        %v1382 = vmax.f32 %v1358, 0.0
        %v1383 = vmax.f32 %v1359, 0.0
        %v1384 = vmax.f32 %v1360, 0.0
        %v1385 = vmax.f32 %v1361, 0.0
        %v1386 = vmax.f32 %v1362, 0.0
        %v1387 = vmax.f32 %v1363, 0.0
        %v1388 = vmax.f32 %v1364, 0.0
        %v1389 = vmul.f32 %v1365, %v323
        %v1390 = vmul.f32 %v1366, %v323
        %v1391 = vmul.f32 %v1367, %v324
        %v1392 = vmul.f32 %v1368, %v324
        %v1393 = vmul.f32 %v1369, %v325
        %v1394 = vmul.f32 %v1370, %v325
        %v1395 = vmul.f32 %v1371, %v326
        %v1396 = vmul.f32 %v1372, %v326
        %v1397 = vmul.f32 %v1373, %v327
        %v1398 = vmul.f32 %v1374, %v327
        %v1399 = vmul.f32 %v1375, %v328
        %v1400 = vmul.f32 %v1376, %v328
        %v1401 = vmul.f32 %v1377, %v329
        %v1402 = vmul.f32 %v1378, %v329
        %v1403 = vmul.f32 %v1379, %v330
        %v1404 = vmul.f32 %v1380, %v330
        %v1405 = vmul.f32 %v1381, %v331
        %v1406 = vmul.f32 %v1382, %v331
        %v1407 = vmul.f32 %v1383, %v332
        %v1408 = vmul.f32 %v1384, %v332
        %v1409 = vmul.f32 %v1385, %v333
        %v1410 = vmul.f32 %v1386, %v333
        %v1411 = vmul.f32 %v1387, %v334
        %v1412 = vmul.f32 %v1388, %v334
        %v1413 = vpack.c.bf16 %v1390, %v1389
        %v1414 = vpack.c.bf16 %v1392, %v1391
        %v1415 = vpack.c.bf16 %v1394, %v1393
        %v1416 = vpack.c.bf16 %v1396, %v1395
        %v1417 = vpack.c.bf16 %v1398, %v1397
        %v1418 = vpack.c.bf16 %v1400, %v1399
        %v1419 = vpack.c.bf16 %v1402, %v1401
        %v1420 = vpack.c.bf16 %v1404, %v1403
        %v1421 = vpack.c.bf16 %v1406, %v1405
        %v1422 = vpack.c.bf16 %v1408, %v1407
        %v1423 = vpack.c.bf16 %v1410, %v1409
        %v1424 = vpack.c.bf16 %v1412, %v1411
        %v1426 = vshrl.u32 %v1413, 16
        %v1428 = vrot.slane %v1426, 7
        %v1429 = vshll.u32 %v1413, 16
        %v1431 = vor.u32 %v1428, %v1429
        %v1433 = vshrl.u32 %v1414, 16
        %v1435 = vrot.slane %v1433, 7
        %v1436 = vshll.u32 %v1414, 16
        %v1438 = vor.u32 %v1435, %v1436
        %v1440 = vshrl.u32 %v1415, 16
        %v1442 = vrot.slane %v1440, 7
        %v1443 = vshll.u32 %v1415, 16
        %v1445 = vor.u32 %v1442, %v1443
        %v1447 = vshrl.u32 %v1416, 16
        %v1449 = vrot.slane %v1447, 7
        %v1450 = vshll.u32 %v1416, 16
        %v1452 = vor.u32 %v1449, %v1450
        %v1454 = vshrl.u32 %v1417, 16
        %v1456 = vrot.slane %v1454, 7
        %v1457 = vshll.u32 %v1417, 16
        %v1459 = vor.u32 %v1456, %v1457
        %v1461 = vshrl.u32 %v1418, 16
        %v1463 = vrot.slane %v1461, 7
        %v1464 = vshll.u32 %v1418, 16
        %v1466 = vor.u32 %v1463, %v1464
        %v1468 = vshrl.u32 %v1419, 16
        %v1470 = vrot.slane %v1468, 7
        %v1471 = vshll.u32 %v1419, 16
        %v1473 = vor.u32 %v1470, %v1471
        %v1475 = vshrl.u32 %v1420, 16
        %v1477 = vrot.slane %v1475, 7
        %v1478 = vshll.u32 %v1420, 16
        %v1480 = vor.u32 %v1477, %v1478
        %v1482 = vshrl.u32 %v1421, 16
        %v1484 = vrot.slane %v1482, 7
        %v1485 = vshll.u32 %v1421, 16
        %v1487 = vor.u32 %v1484, %v1485
        %v1489 = vshrl.u32 %v1422, 16
        %v1491 = vrot.slane %v1489, 7
        %v1492 = vshll.u32 %v1422, 16
        %v1494 = vor.u32 %v1491, %v1492
        %v1496 = vshrl.u32 %v1423, 16
        %v1498 = vrot.slane %v1496, 7
        %v1499 = vshll.u32 %v1423, 16
        %v1501 = vor.u32 %v1498, %v1499
        %v1513 = vsel %vm599, 0, %v1431
        %v1514 = vsel %vm599, 0, %v1438
        %v1515 = vsel %vm599, 0, %v1445
        %v1516 = vsel %vm599, 0, %v1452
        %v1517 = vsel %vm599, 0, %v1459
        %v1518 = vsel %vm599, 0, %v1466
        %v1519 = vsel %vm599, 0, %v1473
        %v1520 = vsel %vm599, 0, %v1480
        %v1521 = vsel %vm599, 0, %v1487
        %v1522 = vsel %vm599, 0, %v1494
        %v1523 = vsel %vm599, 0, %v1501
        %v1524 = vrot.slane %v1429, 1
        %v1525 = vor.u32 %v1426, %v1524
        %v1526 = vrot.slane %v1436, 1
        %v1527 = vor.u32 %v1433, %v1526
        %v1528 = vrot.slane %v1443, 1
        %v1529 = vor.u32 %v1440, %v1528
        %v1530 = vrot.slane %v1450, 1
        %v1531 = vor.u32 %v1447, %v1530
        %v1532 = vrot.slane %v1457, 1
        %v1533 = vor.u32 %v1454, %v1532
        %v1534 = vrot.slane %v1464, 1
        %v1535 = vor.u32 %v1461, %v1534
        %v1536 = vrot.slane %v1471, 1
        %v1537 = vor.u32 %v1468, %v1536
        %v1538 = vrot.slane %v1478, 1
        %v1539 = vor.u32 %v1475, %v1538
        %v1540 = vrot.slane %v1485, 1
        %v1541 = vor.u32 %v1482, %v1540
        %v1542 = vrot.slane %v1492, 1
        %v1543 = vor.u32 %v1489, %v1542
        %v1544 = vrot.slane %v1499, 1
        %v1545 = vor.u32 %v1496, %v1544
        %v1557 = vsel %vm650, %v1525, 0
        %v1558 = vsel %vm650, %v1527, 0
        %v1559 = vsel %vm650, %v1529, 0
        %v1560 = vsel %vm650, %v1531, 0
        %v1561 = vsel %vm650, %v1533, 0
        %v1562 = vsel %vm650, %v1535, 0
        %v1563 = vsel %vm650, %v1537, 0
        %v1564 = vsel %vm650, %v1539, 0
        %v1565 = vsel %vm650, %v1541, 0
        %v1566 = vsel %vm650, %v1543, 0
        %v1567 = vsel %vm650, %v1545, 0
        %1579 = vrot.lane.b32.xlu0 %v1413, 8
        %v1580 = vpop.permute.xlu0 %1579
        %1581 = vrot.lane.b32.xlu0 %v1414, 8
        %v1582 = vpop.permute.xlu0 %1581
        %1583 = vrot.lane.b32.xlu0 %v1415, 8
        %v1584 = vpop.permute.xlu0 %1583
        %1585 = vrot.lane.b32.xlu0 %v1416, 8
        %v1586 = vpop.permute.xlu0 %1585
        %1587 = vrot.lane.b32.xlu0 %v1417, 8
        %v1588 = vpop.permute.xlu0 %1587
        %1589 = vrot.lane.b32.xlu0 %v1418, 8
        %v1590 = vpop.permute.xlu0 %1589
        %1591 = vrot.lane.b32.xlu0 %v1419, 8
        %v1592 = vpop.permute.xlu0 %1591
        %1593 = vrot.lane.b32.xlu0 %v1420, 8
        %v1594 = vpop.permute.xlu0 %1593
        %1595 = vrot.lane.b32.xlu0 %v1421, 8
        %v1596 = vpop.permute.xlu0 %1595
        %1597 = vrot.lane.b32.xlu0 %v1422, 8
        %v1598 = vpop.permute.xlu0 %1597
        %1599 = vrot.lane.b32.xlu0 %v1423, 8
        %v1600 = vpop.permute.xlu0 %1599
        %1612 = vrot.lane.b32.xlu0 %v1557, 16
        %v1613 = vpop.permute.xlu0 %1612
        %1614 = vrot.lane.b32.xlu0 %v1558, 16
        %v1615 = vpop.permute.xlu0 %1614
        %1616 = vrot.lane.b32.xlu0 %v1559, 16
        %v1617 = vpop.permute.xlu0 %1616
        %1618 = vrot.lane.b32.xlu0 %v1560, 16
        %v1619 = vpop.permute.xlu0 %1618
        %1620 = vrot.lane.b32.xlu0 %v1561, 16
        %v1621 = vpop.permute.xlu0 %1620
        %1622 = vrot.lane.b32.xlu0 %v1562, 16
        %v1623 = vpop.permute.xlu0 %1622
        %1624 = vrot.lane.b32.xlu0 %v1563, 16
        %v1625 = vpop.permute.xlu0 %1624
        %1626 = vrot.lane.b32.xlu0 %v1564, 16
        %v1627 = vpop.permute.xlu0 %1626
        %1628 = vrot.lane.b32.xlu0 %v1565, 16
        %v1629 = vpop.permute.xlu0 %1628
        %1630 = vrot.lane.b32.xlu0 %v1566, 16
        %v1631 = vpop.permute.xlu0 %1630
        %1632 = vrot.lane.b32.xlu0 %v1567, 16
        %v1633 = vpop.permute.xlu0 %1632
        %v1636 = vsel %vm735, %v1513, %v1580
        %v1639 = vsel %vm735, %v1514, %v1582
        %v1642 = vsel %vm735, %v1515, %v1584
        %v1645 = vsel %vm735, %v1516, %v1586
        %v1648 = vsel %vm735, %v1517, %v1588
        %v1651 = vsel %vm735, %v1518, %v1590
        %v1654 = vsel %vm735, %v1519, %v1592
        %v1657 = vsel %vm735, %v1520, %v1594
        %v1660 = vsel %vm735, %v1521, %v1596
        %v1663 = vsel %vm735, %v1522, %v1598
        %v1666 = vsel %vm735, %v1523, %v1600
        %v1668 = vsel %vm772, %v1636, %v1613
        %v1670 = vsel %vm772, %v1639, %v1615
        %v1672 = vsel %vm772, %v1642, %v1617
        %v1674 = vsel %vm772, %v1645, %v1619
        %v1676 = vsel %vm772, %v1648, %v1621
        %v1678 = vsel %vm772, %v1651, %v1623
        %v1680 = vsel %vm772, %v1654, %v1625
        %v1682 = vsel %vm772, %v1657, %v1627
        %v1684 = vsel %vm772, %v1660, %v1629
        %v1686 = vsel %vm772, %v1663, %v1631
        %v1688 = vsel %vm772, %v1666, %v1633
        %v1689 = vld [vmem:[%s4] sm:$0xf]
        %v1690 = vld [vmem:[%s4 + $0x4] sm:$0xf]
        %v1691 = vld [vmem:[%s4 + $0x8] sm:$0xf]
        %v1693 = vshrl.u32 %v1424, 16
        %v1695 = vrot.slane %v1693, 7
        %v1696 = vshll.u32 %v1424, 16
        %v1698 = vor.u32 %v1695, %v1696
        %v1700 = vsel %vm599, 0, %v1698
        %v1701 = vrot.slane %v1696, 1
        %v1702 = vor.u32 %v1693, %v1701
        %v1704 = vsel %vm650, %v1702, 0
        %1706 = vrot.lane.b32.xlu0 %v1424, 8
        %v1707 = vpop.permute.xlu0 %1706
        %1709 = vrot.lane.b32.xlu0 %v1704, 16
        %v1710 = vpop.permute.xlu0 %1709
        %v1713 = vsel %vm735, %v1700, %v1707
        %v1715 = vsel %vm772, %v1713, %v1710
        %s1716 = scalar_lea.vmem %s4, 12
        %v1717 = vld [vmem:[%s1716] sm:$0xf]
        %v1718 = vld [vmem:[%s1716 + $0x4] sm:$0xf]
        %v1719 = vld [vmem:[%s1716 + $0x8] sm:$0xf]
        %v1723 = vunpack.c.l.b16 %v1717
        %v1724 = vunpack.c.l.b16 %v1718
        %v1725 = vunpack.c.l.b16 %v1719
        %v1726 = vpack.c.b16 %v1724, %v1723
        %v1727 = vpack.c.b16 %v1725, %v1725
        %v1729 = vsel %vm837, %v1668, 0
        %v1731 = vsel %vm837, %v1670, 0
        %v1733 = vsel %vm837, %v1672, 0
        %v1735 = vsel %vm837, %v1674, 0
        %v1737 = vsel %vm837, %v1676, 0
        %v1739 = vsel %vm837, %v1678, 0
        %v1741 = vsel %vm837, %v1680, 0
        %v1743 = vsel %vm837, %v1682, 0
        %v1745 = vsel %vm837, %v1684, 0
        %v1747 = vsel %vm837, %v1686, 0
        %v1749 = vsel %vm837, %v1688, 0
        %v1751 = vsel %vm837, %v1715, 0
        %v1754 = vsel %vm862, %v1727, 0
        %1756 = vmatprep.subr.bf16.mxu0 0
        %1757 = vmatpush1.bf16.msra.mxu0 0
        %1758 = vmatprep.subr.bf16.mxu0 0
        %1759 = vmatpush1.bf16.msra.mxu0 0
        %1760 = vmatprep.subr.bf16.mxu0 0
        %1761 = vmatpush1.bf16.msra.mxu0 0
        %1762 = vmatprep.subr.bf16.mxu0 0
        %1763 = vmatpush1.bf16.msra.mxu0 0
        %1764 = vmatprep.subr.bf16.mxu0 0
        %1765 = vmatpush1.bf16.msra.mxu0 0
        %1766 = vmatprep.subr.bf16.mxu0 0
        %1767 = vmatpush1.bf16.msra.mxu0 0
        %1768 = vmatprep.subr.bf16.mxu0 0
        %1769 = vmatpush1.bf16.msra.mxu0 %v1754
        %1770 = vmatprep.subr.bf16.mxu0 0
        %1771 = vmatpush1.bf16.msra.mxu0 %v1726
        %1772 = vmatprep.subr.bf16.mxu0 0
        %1773 = vmatpush2.bf16.msra.mxu0 0
        %1774 = vmatprep.subr.bf16.mxu0 0
        %1775 = vmatpush2.bf16.msra.mxu0 0
        %1776 = vmatprep.subr.bf16.mxu0 0
        %1777 = vmatpush2.bf16.msra.mxu0 0
        %1778 = vmatprep.subr.bf16.mxu0 0
        %1779 = vmatpush2.bf16.msra.mxu0 0
        %1780 = vmatprep.subr.bf16.mxu0 0
        %1781 = vmatpush2.bf16.msra.mxu0 0
        %1782 = vmatprep.subr.bf16.mxu0 0
        %1783 = vmatpush2.bf16.msra.mxu0 0
        %1784 = vmatprep.subr.bf16.mxu0 0
        %1785 = vmatpush2.bf16.msra.mxu0 0
        %1786 = vmatprep.subr.bf16.mxu0 0
        %1787 = vmatpush2.bf16.msra.mxu0 0
        %1788 = vmatprep.mubr.bf16.mxu0 0
        %1789 = vmatmul.mubr.bf16.gmra.mxu0 %v1729
        %v1790 = vpop.f32.mrf.mxu0
        %v1791 = vpop.f32.mrf.mxu0
        %v1792 = vpop.f32.mrf.mxu0
        %v1793 = vpop.f32.mrf.mxu0
        %1794 = vmatprep.mubr.bf16.mxu0 0
        %1795 = vmatmul.mubr.bf16.gmra.mxu0 %v1731
        %v1796 = vpop.f32.mrf.mxu0
        %v1797 = vpop.f32.mrf.mxu0
        %v1798 = vpop.f32.mrf.mxu0
        %v1799 = vpop.f32.mrf.mxu0
        %1800 = vmatprep.mubr.bf16.mxu0 0
        %1801 = vmatmul.mubr.bf16.gmra.mxu0 %v1733
        %v1802 = vpop.f32.mrf.mxu0
        %v1803 = vadd.f32 0.0, %v1802
        %v1804 = vpop.f32.mrf.mxu0
        %v1805 = vpop.f32.mrf.mxu0
        %v1806 = vadd.f32 0.0, %v1805
        %v1807 = vpop.f32.mrf.mxu0
        %1808 = vmatprep.mubr.bf16.mxu0 0
        %1809 = vmatmul.mubr.bf16.gmra.mxu0 %v1735
        %v1810 = vpop.f32.mrf.mxu0
        %v1811 = vadd.f32 0.0, %v1810
        %v1812 = vpop.f32.mrf.mxu0
        %v1813 = vpop.f32.mrf.mxu0
        %v1814 = vadd.f32 0.0, %v1813
        %v1815 = vpop.f32.mrf.mxu0
        %1816 = vmatprep.mubr.bf16.mxu0 0
        %1817 = vmatmul.mubr.bf16.gmra.mxu0 %v1737
        %v1818 = vpop.f32.mrf.mxu0
        %v1819 = vadd.f32 0.0, %v1818
        %v1820 = vpop.f32.mrf.mxu0
        %v1821 = vpop.f32.mrf.mxu0
        %v1822 = vadd.f32 0.0, %v1821
        %v1823 = vpop.f32.mrf.mxu0
        %1824 = vmatprep.mubr.bf16.mxu0 0
        %1825 = vmatmul.mubr.bf16.gmra.mxu0 %v1739
        %v1826 = vpop.f32.mrf.mxu0
        %v1827 = vadd.f32 0.0, %v1826
        %v1828 = vpop.f32.mrf.mxu0
        %v1829 = vpop.f32.mrf.mxu0
        %v1830 = vadd.f32 0.0, %v1829
        %v1831 = vpop.f32.mrf.mxu0
        %1832 = vmatprep.mubr.bf16.mxu0 0
        %1833 = vmatmul.mubr.bf16.gmra.mxu0 %v1741
        %v1834 = vpop.f32.mrf.mxu0
        %v1835 = vadd.f32 0.0, %v1834
        %v1836 = vpop.f32.mrf.mxu0
        %v1837 = vpop.f32.mrf.mxu0
        %v1838 = vadd.f32 0.0, %v1837
        %v1839 = vpop.f32.mrf.mxu0
        %1840 = vmatprep.mubr.bf16.mxu0 0
        %1841 = vmatmul.mubr.bf16.gmra.mxu0 %v1743
        %v1842 = vpop.f32.mrf.mxu0
        %v1843 = vadd.f32 0.0, %v1842
        %v1844 = vpop.f32.mrf.mxu0
        %v1845 = vpop.f32.mrf.mxu0
        %v1846 = vadd.f32 0.0, %v1845
        %v1847 = vpop.f32.mrf.mxu0
        %1848 = vmatprep.mubr.bf16.mxu0 0
        %1849 = vmatmul.mubr.bf16.gmra.mxu0 %v1745
        %v1850 = vpop.f32.mrf.mxu0
        %v1851 = vadd.f32 0.0, %v1850
        %v1852 = vpop.f32.mrf.mxu0
        %v1853 = vpop.f32.mrf.mxu0
        %v1854 = vadd.f32 0.0, %v1853
        %v1855 = vpop.f32.mrf.mxu0
        %1856 = vmatprep.mubr.bf16.mxu0 0
        %1857 = vmatmul.mubr.bf16.gmra.mxu0 %v1747
        %v1858 = vpop.f32.mrf.mxu0
        %v1859 = vadd.f32 0.0, %v1858
        %v1860 = vpop.f32.mrf.mxu0
        %v1861 = vpop.f32.mrf.mxu0
        %v1862 = vadd.f32 0.0, %v1861
        %v1863 = vpop.f32.mrf.mxu0
        %1864 = vmatprep.mubr.bf16.mxu0 0
        %1865 = vmatmul.mubr.bf16.gmra.mxu0 %v1749
        %v1866 = vpop.f32.mrf.mxu0
        %v1867 = vpop.f32.mrf.mxu0
        %v1868 = vpop.f32.mrf.mxu0
        %v1869 = vpop.f32.mrf.mxu0
        %1870 = vmatprep.mubr.bf16.mxu0 0
        %1871 = vmatmul.mubr.bf16.gmra.mxu0 %v1751
        %v1872 = vpop.f32.mrf.mxu0
        %v1873 = vpop.f32.mrf.mxu0
        %v1874 = vpop.f32.mrf.mxu0
        %v1875 = vpop.f32.mrf.mxu0
        %1876 = vdwg.mxu0
        %v1880 = vunpack.c.l.b16 %v1689
        %v1881 = vunpack.c.l.b16 %v1690
        %v1882 = vunpack.c.l.b16 %v1691
        %v1883 = vpack.c.b16 %v1881, %v1880
        %v1884 = vpack.c.b16 %v1882, %v1882
        %v1887 = vsel %vm862, %v1884, 0
        %1889 = vmatprep.subr.bf16.mxu0 0
        %1890 = vmatpush1.bf16.msra.mxu0 0
        %1891 = vmatprep.subr.bf16.mxu0 0
        %1892 = vmatpush1.bf16.msra.mxu0 0
        %1893 = vmatprep.subr.bf16.mxu0 0
        %1894 = vmatpush1.bf16.msra.mxu0 0
        %1895 = vmatprep.subr.bf16.mxu0 0
        %1896 = vmatpush1.bf16.msra.mxu0 0
        %1897 = vmatprep.subr.bf16.mxu0 0
        %1898 = vmatpush1.bf16.msra.mxu0 0
        %1899 = vmatprep.subr.bf16.mxu0 0
        %1900 = vmatpush1.bf16.msra.mxu0 0
        %1901 = vmatprep.subr.bf16.mxu0 0
        %1902 = vmatpush1.bf16.msra.mxu0 %v1887
        %1903 = vmatprep.subr.bf16.mxu0 0
        %1904 = vmatpush1.bf16.msra.mxu0 %v1883
        %1905 = vmatprep.subr.bf16.mxu0 0
        %1906 = vmatpush2.bf16.msra.mxu0 0
        %1907 = vmatprep.subr.bf16.mxu0 0
        %1908 = vmatpush2.bf16.msra.mxu0 0
        %1909 = vmatprep.subr.bf16.mxu0 0
        %1910 = vmatpush2.bf16.msra.mxu0 0
        %1911 = vmatprep.subr.bf16.mxu0 0
        %1912 = vmatpush2.bf16.msra.mxu0 0
        %1913 = vmatprep.subr.bf16.mxu0 0
        %1914 = vmatpush2.bf16.msra.mxu0 0
        %1915 = vmatprep.subr.bf16.mxu0 0
        %1916 = vmatpush2.bf16.msra.mxu0 0
        %1917 = vmatprep.subr.bf16.mxu0 0
        %1918 = vmatpush2.bf16.msra.mxu0 0
        %1919 = vmatprep.subr.bf16.mxu0 0
        %1920 = vmatpush2.bf16.msra.mxu0 0
        %1921 = vmatprep.mubr.bf16.mxu0 0
        %1922 = vmatmul.mubr.bf16.gmra.mxu0 %v1004
        %v1923 = vpop.f32.mrf.mxu0
        %v1924 = vpop.f32.mrf.mxu0
        %v1925 = vpop.f32.mrf.mxu0
        %v1926 = vpop.f32.mrf.mxu0
        %1927 = vmatprep.mubr.bf16.mxu0 0
        %1928 = vmatmul.mubr.bf16.gmra.mxu0 %v1729
        %v1929 = vpop.f32.mrf.mxu0
        %v1930 = vpop.f32.mrf.mxu0
        %v1931 = vpop.f32.mrf.mxu0
        %v1932 = vpop.f32.mrf.mxu0
        %1933 = vmatprep.mubr.bf16.mxu0 0
        %1934 = vmatmul.mubr.bf16.gmra.mxu0 %v1731
        %v1935 = vpop.f32.mrf.mxu0
        %v1936 = vadd.f32 %v1803, %v1935
        %v1937 = vpop.f32.mrf.mxu0
        %v1938 = vpop.f32.mrf.mxu0
        %v1939 = vadd.f32 %v1806, %v1938
        %v1940 = vpop.f32.mrf.mxu0
        %1941 = vmatprep.mubr.bf16.mxu0 0
        %1942 = vmatmul.mubr.bf16.gmra.mxu0 %v1733
        %v1943 = vpop.f32.mrf.mxu0
        %v1944 = vadd.f32 %v1811, %v1943
        %v1945 = vpop.f32.mrf.mxu0
        %v1946 = vpop.f32.mrf.mxu0
        %v1947 = vadd.f32 %v1814, %v1946
        %v1948 = vpop.f32.mrf.mxu0
        %1949 = vmatprep.mubr.bf16.mxu0 0
        %1950 = vmatmul.mubr.bf16.gmra.mxu0 %v1735
        %v1951 = vpop.f32.mrf.mxu0
        %v1952 = vadd.f32 %v1819, %v1951
        %v1953 = vpop.f32.mrf.mxu0
        %v1954 = vpop.f32.mrf.mxu0
        %v1955 = vadd.f32 %v1822, %v1954
        %v1956 = vpop.f32.mrf.mxu0
        %1957 = vmatprep.mubr.bf16.mxu0 0
        %1958 = vmatmul.mubr.bf16.gmra.mxu0 %v1737
        %v1959 = vpop.f32.mrf.mxu0
        %v1960 = vadd.f32 %v1827, %v1959
        %v1961 = vpop.f32.mrf.mxu0
        %v1962 = vpop.f32.mrf.mxu0
        %v1963 = vadd.f32 %v1830, %v1962
        %v1964 = vpop.f32.mrf.mxu0
        %1965 = vmatprep.mubr.bf16.mxu0 0
        %1966 = vmatmul.mubr.bf16.gmra.mxu0 %v1739
        %v1967 = vpop.f32.mrf.mxu0
        %v1968 = vadd.f32 %v1835, %v1967
        %v1969 = vpop.f32.mrf.mxu0
        %v1970 = vpop.f32.mrf.mxu0
        %v1971 = vadd.f32 %v1838, %v1970
        %v1972 = vpop.f32.mrf.mxu0
        %1973 = vmatprep.mubr.bf16.mxu0 0
        %1974 = vmatmul.mubr.bf16.gmra.mxu0 %v1741
        %v1975 = vpop.f32.mrf.mxu0
        %v1976 = vadd.f32 %v1843, %v1975
        %v1977 = vpop.f32.mrf.mxu0
        %v1978 = vpop.f32.mrf.mxu0
        %v1979 = vadd.f32 %v1846, %v1978
        %v1980 = vpop.f32.mrf.mxu0
        %1981 = vmatprep.mubr.bf16.mxu0 0
        %1982 = vmatmul.mubr.bf16.gmra.mxu0 %v1743
        %v1983 = vpop.f32.mrf.mxu0
        %v1984 = vadd.f32 %v1851, %v1983
        %v1985 = vpop.f32.mrf.mxu0
        %v1986 = vpop.f32.mrf.mxu0
        %v1987 = vadd.f32 %v1854, %v1986
        %v1988 = vpop.f32.mrf.mxu0
        %1989 = vmatprep.mubr.bf16.mxu0 0
        %1990 = vmatmul.mubr.bf16.gmra.mxu0 %v1745
        %v1991 = vpop.f32.mrf.mxu0
        %v1992 = vadd.f32 %v1859, %v1991
        %v1993 = vpop.f32.mrf.mxu0
        %v1994 = vpop.f32.mrf.mxu0
        %v1995 = vadd.f32 %v1862, %v1994
        %v1996 = vpop.f32.mrf.mxu0
        %1997 = vmatprep.mubr.bf16.mxu0 0
        %1998 = vmatmul.mubr.bf16.gmra.mxu0 %v1747
        %v1999 = vpop.f32.mrf.mxu0
        %v2000 = vpop.f32.mrf.mxu0
        %v2001 = vpop.f32.mrf.mxu0
        %v2002 = vpop.f32.mrf.mxu0
        %2003 = vmatprep.mubr.bf16.mxu0 0
        %2004 = vmatmul.mubr.bf16.gmra.mxu0 %v1749
        %v2005 = vpop.f32.mrf.mxu0
        %v2006 = vpop.f32.mrf.mxu0
        %v2007 = vpop.f32.mrf.mxu0
        %v2008 = vpop.f32.mrf.mxu0
        %2009 = vdwg.mxu0
        %s2010 = scalar_lea.vmem %s4, 24
        %v2011 = vld [vmem:[%s2010] sm:$0xf]
        %v2012 = vld [vmem:[%s2010 + $0x4] sm:$0xf]
        %v2013 = vld [vmem:[%s2010 + $0x8] sm:$0xf]
        %v2017 = vunpack.c.l.b16 %v2011
        %v2018 = vunpack.c.l.b16 %v2012
        %v2019 = vunpack.c.l.b16 %v2013
        %v2020 = vpack.c.b16 %v2018, %v2017
        %v2021 = vpack.c.b16 %v2019, %v2019
        %v2024 = vsel %vm862, %v2021, 0
        %2026 = vmatprep.subr.bf16.mxu0 0
        %2027 = vmatpush1.bf16.msra.mxu0 0
        %2028 = vmatprep.subr.bf16.mxu0 0
        %2029 = vmatpush1.bf16.msra.mxu0 0
        %2030 = vmatprep.subr.bf16.mxu0 0
        %2031 = vmatpush1.bf16.msra.mxu0 0
        %2032 = vmatprep.subr.bf16.mxu0 0
        %2033 = vmatpush1.bf16.msra.mxu0 0
        %2034 = vmatprep.subr.bf16.mxu0 0
        %2035 = vmatpush1.bf16.msra.mxu0 0
        %2036 = vmatprep.subr.bf16.mxu0 0
        %2037 = vmatpush1.bf16.msra.mxu0 0
        %2038 = vmatprep.subr.bf16.mxu0 0
        %2039 = vmatpush1.bf16.msra.mxu0 %v2024
        %2040 = vmatprep.subr.bf16.mxu0 0
        %2041 = vmatpush1.bf16.msra.mxu0 %v2020
        %2042 = vmatprep.subr.bf16.mxu0 0
        %2043 = vmatpush2.bf16.msra.mxu0 0
        %2044 = vmatprep.subr.bf16.mxu0 0
        %2045 = vmatpush2.bf16.msra.mxu0 0
        %2046 = vmatprep.subr.bf16.mxu0 0
        %2047 = vmatpush2.bf16.msra.mxu0 0
        %2048 = vmatprep.subr.bf16.mxu0 0
        %2049 = vmatpush2.bf16.msra.mxu0 0
        %2050 = vmatprep.subr.bf16.mxu0 0
        %2051 = vmatpush2.bf16.msra.mxu0 0
        %2052 = vmatprep.subr.bf16.mxu0 0
        %2053 = vmatpush2.bf16.msra.mxu0 0
        %2054 = vmatprep.subr.bf16.mxu0 0
        %2055 = vmatpush2.bf16.msra.mxu0 0
        %2056 = vmatprep.subr.bf16.mxu0 0
        %2057 = vmatpush2.bf16.msra.mxu0 0
        %2058 = vmatprep.mubr.bf16.mxu0 0
        %2059 = vmatmul.mubr.bf16.gmra.mxu0 %v1731
        %v2060 = vpop.f32.mrf.mxu0
        %v2061 = vpop.f32.mrf.mxu0
        %v2062 = vpop.f32.mrf.mxu0
        %v2063 = vpop.f32.mrf.mxu0
        %2064 = vmatprep.mubr.bf16.mxu0 0
        %2065 = vmatmul.mubr.bf16.gmra.mxu0 %v1733
        %v2066 = vpop.f32.mrf.mxu0
        %v2067 = vpop.f32.mrf.mxu0
        %v2068 = vpop.f32.mrf.mxu0
        %v2069 = vpop.f32.mrf.mxu0
        %2070 = vmatprep.mubr.bf16.mxu0 0
        %2071 = vmatmul.mubr.bf16.gmra.mxu0 %v1735
        %v2072 = vpop.f32.mrf.mxu0
        %v2073 = vadd.f32 0.0, %v2072
        %v2074 = vpop.f32.mrf.mxu0
        %v2075 = vpop.f32.mrf.mxu0
        %v2076 = vadd.f32 0.0, %v2075
        %v2077 = vpop.f32.mrf.mxu0
        %2078 = vmatprep.mubr.bf16.mxu0 0
        %2079 = vmatmul.mubr.bf16.gmra.mxu0 %v1737
        %v2080 = vpop.f32.mrf.mxu0
        %v2081 = vadd.f32 0.0, %v2080
        %v2082 = vpop.f32.mrf.mxu0
        %v2083 = vpop.f32.mrf.mxu0
        %v2084 = vadd.f32 0.0, %v2083
        %v2085 = vpop.f32.mrf.mxu0
        %2086 = vmatprep.mubr.bf16.mxu0 0
        %2087 = vmatmul.mubr.bf16.gmra.mxu0 %v1739
        %v2088 = vpop.f32.mrf.mxu0
        %v2089 = vadd.f32 0.0, %v2088
        %v2090 = vpop.f32.mrf.mxu0
        %v2091 = vpop.f32.mrf.mxu0
        %v2092 = vadd.f32 0.0, %v2091
        %v2093 = vpop.f32.mrf.mxu0
        %2094 = vmatprep.mubr.bf16.mxu0 0
        %2095 = vmatmul.mubr.bf16.gmra.mxu0 %v1741
        %v2096 = vpop.f32.mrf.mxu0
        %v2097 = vadd.f32 0.0, %v2096
        %v2098 = vpop.f32.mrf.mxu0
        %v2099 = vpop.f32.mrf.mxu0
        %v2100 = vadd.f32 0.0, %v2099
        %v2101 = vpop.f32.mrf.mxu0
        %2102 = vmatprep.mubr.bf16.mxu0 0
        %2103 = vmatmul.mubr.bf16.gmra.mxu0 %v1743
        %v2104 = vpop.f32.mrf.mxu0
        %v2105 = vadd.f32 0.0, %v2104
        %v2106 = vpop.f32.mrf.mxu0
        %v2107 = vpop.f32.mrf.mxu0
        %v2108 = vadd.f32 0.0, %v2107
        %v2109 = vpop.f32.mrf.mxu0
        %2110 = vmatprep.mubr.bf16.mxu0 0
        %2111 = vmatmul.mubr.bf16.gmra.mxu0 %v1745
        %v2112 = vpop.f32.mrf.mxu0
        %v2113 = vadd.f32 0.0, %v2112
        %v2114 = vpop.f32.mrf.mxu0
        %v2115 = vpop.f32.mrf.mxu0
        %v2116 = vadd.f32 0.0, %v2115
        %v2117 = vpop.f32.mrf.mxu0
        %2118 = vmatprep.mubr.bf16.mxu0 0
        %2119 = vmatmul.mubr.bf16.gmra.mxu0 %v1747
        %v2120 = vpop.f32.mrf.mxu0
        %v2121 = vadd.f32 0.0, %v2120
        %v2122 = vpop.f32.mrf.mxu0
        %v2123 = vpop.f32.mrf.mxu0
        %v2124 = vadd.f32 0.0, %v2123
        %v2125 = vpop.f32.mrf.mxu0
        %2126 = vmatprep.mubr.bf16.mxu0 0
        %2127 = vmatmul.mubr.bf16.gmra.mxu0 %v1749
        %v2128 = vpop.f32.mrf.mxu0
        %v2129 = vadd.f32 0.0, %v2128
        %v2130 = vpop.f32.mrf.mxu0
        %v2131 = vpop.f32.mrf.mxu0
        %v2132 = vadd.f32 0.0, %v2131
        %v2133 = vpop.f32.mrf.mxu0
        %2134 = vmatprep.mubr.bf16.mxu0 0
        %2135 = vmatmul.mubr.bf16.gmra.mxu0 %v1751
        %v2136 = vpop.f32.mrf.mxu0
        %v2137 = vpop.f32.mrf.mxu0
        %v2138 = vpop.f32.mrf.mxu0
        %v2139 = vpop.f32.mrf.mxu0
        %2140 = vmatprep.mubr.bf16.mxu0 0
        %2141 = vmatmul.mubr.bf16.gmra.mxu0 %v1004
        %v2142 = vpop.f32.mrf.mxu0
        %v2143 = vpop.f32.mrf.mxu0
        %v2144 = vpop.f32.mrf.mxu0
        %v2145 = vpop.f32.mrf.mxu0
        %2146 = vdwg.mxu0
        %v2147 = vadd.f32 %v1936, %v2073
        %v2148 = vadd.f32 %v1939, %v2076
        %v2149 = vadd.f32 %v1944, %v2081
        %v2150 = vadd.f32 %v1947, %v2084
        %v2151 = vadd.f32 %v1952, %v2089
        %v2152 = vadd.f32 %v1955, %v2092
        %v2153 = vadd.f32 %v1960, %v2097
        %v2154 = vadd.f32 %v1963, %v2100
        %v2155 = vadd.f32 %v1968, %v2105
        %v2156 = vadd.f32 %v1971, %v2108
        %v2157 = vadd.f32 %v1976, %v2113
        %v2158 = vadd.f32 %v1979, %v2116
        %v2159 = vadd.f32 %v1984, %v2121
        %v2160 = vadd.f32 %v1987, %v2124
        %v2161 = vadd.f32 %v1992, %v2129
        %v2162 = vadd.f32 %v1995, %v2132
        %v2163 = vadd.f32 %v2147, %v363
        %v2164 = vadd.f32 %v2148, %v364
        %v2165 = vadd.f32 %v2149, %v365
        %v2166 = vadd.f32 %v2150, %v366
        %v2167 = vadd.f32 %v2151, %v367
        %v2168 = vadd.f32 %v2152, %v368
        %v2169 = vadd.f32 %v2153, %v369
        %v2170 = vadd.f32 %v2154, %v370
        %v2171 = vadd.f32 %v2155, %v371
        %v2172 = vadd.f32 %v2156, %v372
        %v2173 = vadd.f32 %v2157, %v373
        %v2174 = vadd.f32 %v2158, %v374
        %v2175 = vadd.f32 %v2159, %v375
        %v2176 = vadd.f32 %v2160, %v376
        %v2177 = vadd.f32 %v2161, %v377
        %v2178 = vadd.f32 %v2162, %v378
        %v2179 = vpack.c.bf16 %v2164, %v2163
        %v2180 = vpack.c.bf16 %v2166, %v2165
        %v2181 = vpack.c.bf16 %v2168, %v2167
        %v2182 = vpack.c.bf16 %v2170, %v2169
        %v2183 = vpack.c.bf16 %v2172, %v2171
        %v2184 = vpack.c.bf16 %v2174, %v2173
        %v2185 = vpack.c.bf16 %v2176, %v2175
        %v2186 = vpack.c.bf16 %v2178, %v2177
        %v2189 = vpack.i.b16 %v2180, %v2179
        %v2191 = vshrl.u32 %v2179, 16
        %v2192 = vshrl.u32 %v2180, 16
        %v2193 = vpack.i.b16 %v2192, %v2191
        %v2197 = vpack.i.b16 %v2182, %v2181
        %v2199 = vshrl.u32 %v2181, 16
        %v2200 = vshrl.u32 %v2182, 16
        %v2201 = vpack.i.b16 %v2200, %v2199
        %v2205 = vpack.i.b16 %v2184, %v2183
        %v2207 = vshrl.u32 %v2183, 16
        %v2208 = vshrl.u32 %v2184, 16
        %v2209 = vpack.i.b16 %v2208, %v2207
        %v2213 = vpack.i.b16 %v2186, %v2185
        %v2215 = vshrl.u32 %v2185, 16
        %v2216 = vshrl.u32 %v2186, 16
        %v2217 = vpack.i.b16 %v2216, %v2215
        %v2219 = vcombine.low %v2189, %v2205
        %v2220 = vcombine.high %v2189, %v2205
        %v2222 = vunpack.c.l.s4 1983009808
        %v2223 = vunpack.c.0.s8 %v2222
        %v2224 = vlaneseq
        %v2225 = vshrl.u32 %v2224, 7
        %v2226 = vsub.s32 %v2223, %v2225
        %v2227 = vrot.slane %v2219, %v2226
        %v2229 = vunpack.c.l.s4 1983009808
        %v2230 = vunpack.c.0.s8 %v2229
        %v2231 = vlaneseq
        %v2232 = vshrl.u32 %v2231, 7
        %v2233 = vsub.s32 %v2230, %v2232
        %v2234 = vrot.slane %v2220, %v2233
        %v2235 = vcombine.low %v2197, %v2213
        %v2236 = vcombine.high %v2197, %v2213
        %v2238 = vunpack.c.l.s4 1983009808
        %v2239 = vunpack.c.0.s8 %v2238
        %v2240 = vlaneseq
        %v2241 = vshrl.u32 %v2240, 7
        %v2242 = vsub.s32 %v2239, %v2241
        %v2243 = vrot.slane %v2235, %v2242
        %v2245 = vunpack.c.l.s4 1983009808
        %v2246 = vunpack.c.0.s8 %v2245
        %v2247 = vlaneseq
        %v2248 = vshrl.u32 %v2247, 7
        %v2249 = vsub.s32 %v2246, %v2248
        %v2250 = vrot.slane %v2236, %v2249
        %v2251 = vcombine.low %v2227, %v2243
        %v2252 = vcombine.high %v2227, %v2243
        %v2254 = vunpack.c.l.s4 1934713408
        %v2255 = vunpack.c.0.s8 %v2254
        %v2256 = vlaneseq
        %v2257 = vshrl.u32 %v2256, 7
        %v2258 = vsub.s32 %v2255, %v2257
        %v2259 = vrot.slane %v2251, %v2258
        %v2261 = vunpack.c.l.s4 1934713408
        %v2262 = vunpack.c.0.s8 %v2261
        %v2263 = vlaneseq
        %v2264 = vshrl.u32 %v2263, 7
        %v2265 = vsub.s32 %v2262, %v2264
        %v2266 = vrot.slane %v2252, %v2265
        %v2267 = vcombine.low %v2234, %v2250
        %v2268 = vcombine.high %v2234, %v2250
        %v2270 = vunpack.c.l.s4 1934713408
        %v2271 = vunpack.c.0.s8 %v2270
        %v2272 = vlaneseq
        %v2273 = vshrl.u32 %v2272, 7
        %v2274 = vsub.s32 %v2271, %v2273
        %v2275 = vrot.slane %v2267, %v2274
        %v2277 = vunpack.c.l.s4 1934713408
        %v2278 = vunpack.c.0.s8 %v2277
        %v2279 = vlaneseq
        %v2280 = vshrl.u32 %v2279, 7
        %v2281 = vsub.s32 %v2278, %v2280
        %v2282 = vrot.slane %v2268, %v2281
        %v2283 = vcombine.high %v2259, 0
        %v2284 = vcombine.high %v2266, 0
        %v2285 = vcombine.high %v2275, 0
        %v2286 = vcombine.high %v2282, 0
        %v2287 = vcombine.low %v2193, %v2209
        %v2288 = vcombine.high %v2193, %v2209
        %v2290 = vunpack.c.l.s4 1983009808
        %v2291 = vunpack.c.0.s8 %v2290
        %v2292 = vlaneseq
        %v2293 = vshrl.u32 %v2292, 7
        %v2294 = vsub.s32 %v2291, %v2293
        %v2295 = vrot.slane %v2287, %v2294
        %v2297 = vunpack.c.l.s4 1983009808
        %v2298 = vunpack.c.0.s8 %v2297
        %v2299 = vlaneseq
        %v2300 = vshrl.u32 %v2299, 7
        %v2301 = vsub.s32 %v2298, %v2300
        %v2302 = vrot.slane %v2288, %v2301
        %v2303 = vcombine.low %v2201, %v2217
        %v2304 = vcombine.high %v2201, %v2217
        %v2306 = vunpack.c.l.s4 1983009808
        %v2307 = vunpack.c.0.s8 %v2306
        %v2308 = vlaneseq
        %v2309 = vshrl.u32 %v2308, 7
        %v2310 = vsub.s32 %v2307, %v2309
        %v2311 = vrot.slane %v2303, %v2310
        %v2313 = vunpack.c.l.s4 1983009808
        %v2314 = vunpack.c.0.s8 %v2313
        %v2315 = vlaneseq
        %v2316 = vshrl.u32 %v2315, 7
        %v2317 = vsub.s32 %v2314, %v2316
        %v2318 = vrot.slane %v2304, %v2317
        %v2319 = vcombine.low %v2295, %v2311
        %v2320 = vcombine.high %v2295, %v2311
        %v2322 = vunpack.c.l.s4 1934713408
        %v2323 = vunpack.c.0.s8 %v2322
        %v2324 = vlaneseq
        %v2325 = vshrl.u32 %v2324, 7
        %v2326 = vsub.s32 %v2323, %v2325
        %v2327 = vrot.slane %v2319, %v2326
        %v2329 = vunpack.c.l.s4 1934713408
        %v2330 = vunpack.c.0.s8 %v2329
        %v2331 = vlaneseq
        %v2332 = vshrl.u32 %v2331, 7
        %v2333 = vsub.s32 %v2330, %v2332
        %v2334 = vrot.slane %v2320, %v2333
        %v2335 = vcombine.low %v2302, %v2318
        %v2336 = vcombine.high %v2302, %v2318
        %v2338 = vunpack.c.l.s4 1934713408
        %v2339 = vunpack.c.0.s8 %v2338
        %v2340 = vlaneseq
        %v2341 = vshrl.u32 %v2340, 7
        %v2342 = vsub.s32 %v2339, %v2341
        %v2343 = vrot.slane %v2335, %v2342
        %v2345 = vunpack.c.l.s4 1934713408
        %v2346 = vunpack.c.0.s8 %v2345
        %v2347 = vlaneseq
        %v2348 = vshrl.u32 %v2347, 7
        %v2349 = vsub.s32 %v2346, %v2348
        %v2350 = vrot.slane %v2336, %v2349
        %v2351 = vcombine.high %v2327, 0
        %v2352 = vcombine.high %v2334, 0
        %v2353 = vcombine.high %v2343, 0
        %v2354 = vcombine.high %v2350, 0
        %2356 = vrot.lane.b32.xlu0 %v2327, 8
        %v2357 = vpop.permute.xlu0 %2356
        %2359 = vrot.lane.b32.xlu0 %v2283, 16
        %v2360 = vpop.permute.xlu0 %2359
        %2362 = vrot.lane.b32.xlu0 %v2351, 24
        %v2363 = vpop.permute.xlu0 %2362
        %2365 = vrot.lane.b32.xlu0 %v2266, 32
        %v2366 = vpop.permute.xlu0 %2365
        %2368 = vrot.lane.b32.xlu0 %v2334, 40
        %v2369 = vpop.permute.xlu0 %2368
        %2371 = vrot.lane.b32.xlu0 %v2284, 48
        %v2372 = vpop.permute.xlu0 %2371
        %2374 = vrot.lane.b32.xlu0 %v2352, 56
        %v2375 = vpop.permute.xlu0 %2374
        %2377 = vrot.lane.b32.xlu0 %v2275, 64
        %v2378 = vpop.permute.xlu0 %2377
        %2380 = vrot.lane.b32.xlu0 %v2343, 72
        %v2381 = vpop.permute.xlu0 %2380
        %2383 = vrot.lane.b32.xlu0 %v2285, 80
        %v2384 = vpop.permute.xlu0 %2383
        %2386 = vrot.lane.b32.xlu0 %v2353, 88
        %v2387 = vpop.permute.xlu0 %2386
        %2389 = vrot.lane.b32.xlu0 %v2282, 96
        %v2390 = vpop.permute.xlu0 %2389
        %2392 = vrot.lane.b32.xlu0 %v2350, 104
        %v2393 = vpop.permute.xlu0 %2392
        %2395 = vrot.lane.b32.xlu0 %v2286, 112
        %v2396 = vpop.permute.xlu0 %2395
        %2398 = vrot.lane.b32.xlu0 %v2354, 120
        %v2399 = vpop.permute.xlu0 %2398
        %v2402 = vsel %vm735, %v2259, %v2357
        %v2404 = vsel %vm772, %v2402, %v2360
        %v2406 = vsel %vm837, %v2404, %v2363
        %vm2407 = vcmask 261120
        %v2409 = vsel %vm2407, %v2406, %v2366
        %vm2410 = vcmask 326656
        %v2412 = vsel %vm2410, %v2409, %v2369
        %vm2413 = vcmask 392192
        %v2415 = vsel %vm2413, %v2412, %v2372
        %vm2416 = vcmask 457728
        %v2418 = vsel %vm2416, %v2415, %v2375
        %vm2419 = vcmask 523264
        %v2421 = vsel %vm2419, %v2418, %v2378
        %vm2422 = vcmask 588800
        %v2424 = vsel %vm2422, %v2421, %v2381
        %vm2425 = vcmask 654336
        %v2427 = vsel %vm2425, %v2424, %v2384
        %vm2428 = vcmask 719872
        %v2430 = vsel %vm2428, %v2427, %v2387
        %vm2431 = vcmask 785408
        %v2433 = vsel %vm2431, %v2430, %v2390
        %vm2434 = vcmask 850944
        %v2436 = vsel %vm2434, %v2433, %v2393
        %vm2437 = vcmask 916480
        %v2439 = vsel %vm2437, %v2436, %v2396
        %vm2440 = vcmask 982016
        %v2442 = vsel %vm2440, %v2439, %v2399
        %2444 = vst [vmem:[%s241] sm:$0xf] %v2442
        %s2445 = sand.u32 %s153, 1
        %s2446 = scalar_lea.sflag [#allocation3], %s2445
        %s2447 = sand.u32 %s153, 1
        %s2448 = smul.addr %s2447, 4
        %s2449 = scalar_lea.vmem [#allocation2], %s2448
        // Predicated region
        $region41: #{tpu_custom_call.1} parent=39 // pred_check
          %p2450 = pneg %p163
        $region42: #{tpu_custom_call.1} parent=39 // pred_check_branch
          %2452 = sbr.rel (%p2450) target = $region44
        $region43: #{tpu_custom_call.1} parent=39 // pred_region
          %s2454 = ssub.s32 64, 64
          %2455 = vsyncadd %s2446, %s2454
          %s2456 = smul.addr %s23, 2
          %s2457 = sadd.s32 %s24, %s2456
          %s2458 = smul.addr %s2457, 64
          %s2459 = scalar_lea.hbm %s5, %s2458
          %s2461 = sshll.u32 %s2449, 4
          %s2462 = int_to_ptr.vmem [resolvable:$true] %s2461
          %2464 = dma.vmem_to_hbm [thread:$0]  %s2462, 64, %s2459, %s2446
        $region44: #{tpu_custom_call.1} parent=39 // pred_fallthru
          _
      $region40: #{tpu_custom_call.1} parent=5 // pred_fallthru
        _
      %p2465 = scmp.le.s32.totalorder 2, %s14
      // Predicated region
      $region45: #{tpu_custom_call.1} parent=5 // pred_check
        %p2466 = pneg %p2465
      $region46: #{tpu_custom_call.1} parent=5 // pred_check_branch
        %2468 = sbr.rel (%p2466) target = $region48
      $region47: #{tpu_custom_call.1} parent=5 // pred_region
        %s2469 = ssub.s32 %s14, 2
        // Predicated region
        $region49: #{tpu_custom_call.1} parent=47 // pred_check
          %p2470 = pneg %p169
        $region50: #{tpu_custom_call.1} parent=47 // pred_check_branch
          %2472 = sbr.rel (%p2470) target = $region52
        $region51: #{tpu_custom_call.1} parent=47 // pred_region
          %s2473 = sand.u32 %s154, 1
          %s2474 = scalar_lea.sflag [#allocation3], %s2473
          %s2475 = sand.u32 %s154, 1
          %s2476 = smul.addr %s2475, 4
          %s2477 = scalar_lea.vmem [#allocation2], %s2476
          %2478 = dma.done %s2474, 64
        $region52: #{tpu_custom_call.1} parent=47 // pred_fallthru
          _
      $region48: #{tpu_custom_call.1} parent=5 // pred_fallthru
        _
    $region6: #{tpu_custom_call.1} parent=1 // loop_footer
      %s18 = sadd.s32 1, %s14
    $region7: #{tpu_custom_call.1} parent=1 // loop_footer_branch
      %13 = sbr.rel target = $region3
    $region8: #{tpu_custom_call.1} parent=1 // loop_exit
      _
    %2479 = vsyncpa [#allocation3], 1
    %s2480 = scalar_lea.sflag [#allocation3], 1
    %2481 = vsyncpa %s2480, 1

</llo_original>
